<compile_context>
chip_gen: v6e
topology: v6e:2x2x1
jax: 0.10.0
libtpu: 0.0.40
codegen_flags: <defaults>
</compile_context>

<pallas_src>
import functools

import jax
import jax.numpy as jnp
from jax.experimental import pallas as pl
from jax.experimental.pallas import tpu as pltpu


# Small demo shapes (scaled from seq_len=238, 8192/2048/512 hidden widths).
SEQ_LEN, INPUT_DIM, EMPTY = 8, 20, 10
H_EMBED, H_LN, H_I = 512, 256, 128
LANE = 128  # lane width used to pad the tiny i2/j3 output dims


# ---------------------------------------------------------------------------
# Fused forward kernel: emb1 -> ReLU -> emb2 -> LayerNorm -> i-head -> j-head.
# All operands are full-block VMEM residents; no grid.
# ---------------------------------------------------------------------------
def _qnet_kernel(x_ref,
                 w_e1, b_e1, w_e2, b_e2, g_ln, bt_ln,
                 w_i1, b_i1, w_i2, b_i2,
                 w_j1x, w_j1i, b_j1, w_j2, b_j2, w_j3, b_j3,
                 i_out, j_out, *, seq_len, out_dim):
    def mm(a, w_ref):
        # bf16 operands on the MXU, f32 accumulation; elementwise stays f32.
        return jnp.dot(a.astype(jnp.bfloat16), w_ref[...],
                       preferred_element_type=jnp.float32)

    x = x_ref[...].astype(jnp.float32)

    # embedding_mlp: Linear -> ReLU -> Linear -> LayerNorm (LN fused here).
    h = jnp.maximum(mm(x, w_e1) + b_e1[...], 0.0)
    e = mm(h, w_e2) + b_e2[...]
    mean = jnp.mean(e, axis=-1, keepdims=True)
    var = jnp.mean((e - mean) ** 2, axis=-1, keepdims=True)
    xln = (e - mean) * jax.lax.rsqrt(var + 1e-5) * g_ln[...] + bt_ln[...]

    # mlp_i: Linear -> ReLU -> Linear.  w_i2/b_i2 are zero-padded to 128 cols,
    # so i_full[:, seq_len:] == 0 exactly.
    hi = jnp.maximum(mm(xln, w_i1) + b_i1[...], 0.0)
    i_full = mm(hi, w_i2) + b_i2[...]                  # (B, 128)
    i_out[...] = i_full[:, :seq_len]

    # mlp_j: concat([x, i_logits]) @ Wj1 == x @ Wj1[:H_LN] + i @ Wj1[H_LN:].
    # w_j1i rows beyond seq_len are zero, so the padded i columns contribute 0.
    hj = jnp.maximum(mm(xln, w_j1x) + mm(i_full, w_j1i) + b_j1[...], 0.0)
    hj = jnp.maximum(mm(hj, w_j2) + b_j2[...], 0.0)
    j_full = mm(hj, w_j3) + b_j3[...]                  # (B, 128)
    j_out[...] = j_full[:, :out_dim]


@functools.partial(jax.jit, static_argnames=("seq_len", "out_dim"))
def qnet_forward(params, features_long, *, seq_len, out_dim):
    B, L, D = features_long.shape
    x = features_long.reshape(B, L * D)                # reshape(B, seq_len*20)

    vmem = pl.BlockSpec(memory_space=pltpu.MemorySpace.VMEM)
    kernel = functools.partial(_qnet_kernel, seq_len=seq_len, out_dim=out_dim)
    i_logits, j_logits = pl.pallas_call(
        kernel,
        out_shape=(jax.ShapeDtypeStruct((B, seq_len), jnp.float32),
                   jax.ShapeDtypeStruct((B, out_dim), jnp.float32)),
        in_specs=[vmem] * 18,
        out_specs=(vmem, vmem),
    )(x,
      params["w_e1"], params["b_e1"], params["w_e2"], params["b_e2"],
      params["g_ln"], params["bt_ln"],
      params["w_i1"], params["b_i1"], params["w_i2"], params["b_i2"],
      params["w_j1x"], params["w_j1i"], params["b_j1"],
      params["w_j2"], params["b_j2"], params["w_j3"], params["b_j3"])
    return i_logits, j_logits


# ---------------------------------------------------------------------------
# Parameter init: weights stored (in, out) bf16, biases (1, out) f32.
# All padding / weight-splitting happens ONCE here, not in the forward path.
# ---------------------------------------------------------------------------
def init_qnet_params(key, seq_len=SEQ_LEN, input_dim=INPUT_DIM, empty=EMPTY,
                     h_embed=H_EMBED, h_ln=H_LN, h_i=H_I,
                     weight_dtype=jnp.bfloat16):
    def lin(k, fan_in, fan_out, pad_out=None):
        kw, kb = jax.random.split(k)
        scale = 1.0 / jnp.sqrt(jnp.float32(fan_in))
        w = jax.random.uniform(kw, (fan_in, fan_out), jnp.float32, -scale, scale)
        b = jax.random.uniform(kb, (fan_out,), jnp.float32, -scale, scale)
        if pad_out is not None:
            w = jnp.pad(w, ((0, 0), (0, pad_out - fan_out)))
            b = jnp.pad(b, (0, pad_out - fan_out))
        return w.astype(weight_dtype), b.reshape(1, -1).astype(jnp.float32)

    keys = jax.random.split(key, 7)
    flat = seq_len * input_dim
    out_dim = input_dim + empty

    w_e1, b_e1 = lin(keys[0], flat, h_embed)
    w_e2, b_e2 = lin(keys[1], h_embed, h_ln)
    g_ln = jnp.ones((1, h_ln), jnp.float32)
    bt_ln = jnp.zeros((1, h_ln), jnp.float32)
    w_i1, b_i1 = lin(keys[2], h_ln, h_i)
    w_i2, b_i2 = lin(keys[3], h_i, seq_len, pad_out=LANE)       # pad N -> 128
    # mlp_j first layer takes concat([x (h_ln), i_logits (seq_len)]);
    # store it pre-split so the kernel does x@W1a + i@W1b (no concat).
    w_j1, b_j1 = lin(keys[4], h_ln + seq_len, h_embed)
    w_j1x = w_j1[:h_ln]
    w_j1i = jnp.pad(w_j1[h_ln:], ((0, LANE - seq_len), (0, 0)))  # rows -> 128
    w_j2, b_j2 = lin(keys[5], h_embed, h_ln)
    w_j3, b_j3 = lin(keys[6], h_ln, out_dim, pad_out=LANE)       # pad N -> 128

    return {
        "w_e1": w_e1, "b_e1": b_e1, "w_e2": w_e2, "b_e2": b_e2,
        "g_ln": g_ln, "bt_ln": bt_ln,
        "w_i1": w_i1, "b_i1": b_i1, "w_i2": w_i2, "b_i2": b_i2,
        "w_j1x": w_j1x, "w_j1i": w_j1i, "b_j1": b_j1,
        "w_j2": w_j2, "b_j2": b_j2, "w_j3": w_j3, "b_j3": b_j3,
    }


# ---------------------------------------------------------------------------
# Pure-JAX reference (original module structure with explicit concat),
# using the exact same bf16-operand / f32-accumulate matmul quantization.
# ---------------------------------------------------------------------------
def qnet_ref(params, features_long, *, seq_len, input_dim, empty):
    B, L, D = features_long.shape
    x = features_long.reshape(B, L * D)
    out_dim = input_dim + empty

    def mm(a, w):
        return jnp.dot(a.astype(jnp.bfloat16), w.astype(jnp.bfloat16),
                       preferred_element_type=jnp.float32)

    def lin(v, w, b, relu=False):
        y = mm(v, w) + b
        return jnp.maximum(y, 0.0) if relu else y

    h = lin(x, params["w_e1"], params["b_e1"], relu=True)
    e = lin(h, params["w_e2"], params["b_e2"])
    mean = jnp.mean(e, axis=-1, keepdims=True)
    var = jnp.mean((e - mean) ** 2, axis=-1, keepdims=True)
    xln = (e - mean) / jnp.sqrt(var + 1e-5) * params["g_ln"] + params["bt_ln"]

    hi = lin(xln, params["w_i1"], params["b_i1"], relu=True)
    i_logits = lin(hi, params["w_i2"][:, :seq_len], params["b_i2"][:, :seq_len])

    # Original semantics: concat then one Linear.
    w_j1 = jnp.concatenate([params["w_j1x"], params["w_j1i"][:seq_len]], axis=0)
    xj = jnp.concatenate([xln, i_logits], axis=-1)
    hj = lin(xj, w_j1, params["b_j1"], relu=True)
    hj = lin(hj, params["w_j2"], params["b_j2"], relu=True)
    j_logits = lin(hj, params["w_j3"][:, :out_dim], params["b_j3"][:, :out_dim])
    return i_logits, j_logits


if __name__ == "__main__":
    B = 2
    key = jax.random.PRNGKey(0)
    kp, kx = jax.random.split(key)
    params = init_qnet_params(kp)
    features_long = jax.random.normal(kx, (B, SEQ_LEN, INPUT_DIM), jnp.float32)

    i_logits, j_logits = qnet_forward(params, features_long,
                                      seq_len=SEQ_LEN,
                                      out_dim=INPUT_DIM + EMPTY)
    jax.block_until_ready((i_logits, j_logits))

    assert i_logits.shape == (B, SEQ_LEN), i_logits.shape
    assert j_logits.shape == (B, INPUT_DIM + EMPTY), j_logits.shape

    ri, rj = qnet_ref(params, features_long, seq_len=SEQ_LEN,
                      input_dim=INPUT_DIM, empty=EMPTY)
    assert jnp.allclose(i_logits, ri, atol=1e-2, rtol=1e-2), \
        float(jnp.max(jnp.abs(i_logits - ri)))
    assert jnp.allclose(j_logits, rj, atol=1e-2, rtol=1e-2), \
        float(jnp.max(jnp.abs(j_logits - rj)))

    print("KERNEL_OK")
</pallas_src>

<mosaic_0001>
module attributes {stable_mosaic.version = 11 : i64} {
  func.func @_qnet_kernel(%arg0: memref<2x160xf32, #tpu.memory_space<vmem>>, %arg1: memref<160x512xbf16, #tpu.memory_space<vmem>>, %arg2: memref<1x512xf32, #tpu.memory_space<vmem>>, %arg3: memref<512x256xbf16, #tpu.memory_space<vmem>>, %arg4: memref<1x256xf32, #tpu.memory_space<vmem>>, %arg5: memref<1x256xf32, #tpu.memory_space<vmem>>, %arg6: memref<1x256xf32, #tpu.memory_space<vmem>>, %arg7: memref<256x128xbf16, #tpu.memory_space<vmem>>, %arg8: memref<1x128xf32, #tpu.memory_space<vmem>>, %arg9: memref<128x128xbf16, #tpu.memory_space<vmem>>, %arg10: memref<1x128xf32, #tpu.memory_space<vmem>>, %arg11: memref<256x512xbf16, #tpu.memory_space<vmem>>, %arg12: memref<128x512xbf16, #tpu.memory_space<vmem>>, %arg13: memref<1x512xf32, #tpu.memory_space<vmem>>, %arg14: memref<512x256xbf16, #tpu.memory_space<vmem>>, %arg15: memref<1x256xf32, #tpu.memory_space<vmem>>, %arg16: memref<256x128xbf16, #tpu.memory_space<vmem>>, %arg17: memref<1x128xf32, #tpu.memory_space<vmem>>, %arg18: memref<2x8xf32, #tpu.memory_space<vmem>>, %arg19: memref<2x30xf32, #tpu.memory_space<vmem>>) attributes {dimension_semantics = [], scalar_prefetch = 0 : i64, scratch_operands = 0 : i64, tpu.core_type = #tpu.core_type<tc>} {
    %c0 = arith.constant 0 : index
    %c0_0 = arith.constant 0 : index
    %0 = vector.load %arg0[%c0, %c0_0] : memref<2x160xf32, #tpu.memory_space<vmem>>, vector<2x160xf32>
    %1 = arith.truncf %0 : vector<2x160xf32> to vector<2x160xbf16>
    %c0_1 = arith.constant 0 : index
    %c0_2 = arith.constant 0 : index
    %2 = vector.load %arg1[%c0_1, %c0_2] : memref<160x512xbf16, #tpu.memory_space<vmem>>, vector<160x512xbf16>
    %cst = arith.constant dense<0.000000e+00> : vector<2x512xf32>
    %3 = tpu.matmul %1, %2, %cst {dimension_numbers = #tpu.dot_dimension_numbers<[1], [0], [0], [1], [0, 0, 1, 1], [], []>} : vector<2x160xbf16>, vector<160x512xbf16>, vector<2x512xf32> -> vector<2x512xf32>
    %c0_3 = arith.constant 0 : index
    %c0_4 = arith.constant 0 : index
    %4 = vector.load %arg2[%c0_3, %c0_4] : memref<1x512xf32, #tpu.memory_space<vmem>>, vector<1x512xf32>
    %5 = vector.broadcast %4 : vector<1x512xf32> to vector<2x512xf32>
    %6 = arith.addf %3, %5 : vector<2x512xf32>
    %cst_5 = arith.constant 0.000000e+00 : f32
    %7 = vector.broadcast %cst_5 : f32 to vector<2x512xf32>
    %8 = arith.maximumf %6, %7 : vector<2x512xf32>
    %9 = arith.truncf %8 : vector<2x512xf32> to vector<2x512xbf16>
    %c0_6 = arith.constant 0 : index
    %c0_7 = arith.constant 0 : index
    %10 = vector.load %arg3[%c0_6, %c0_7] : memref<512x256xbf16, #tpu.memory_space<vmem>>, vector<512x256xbf16>
    %cst_8 = arith.constant dense<0.000000e+00> : vector<2x256xf32>
    %11 = tpu.matmul %9, %10, %cst_8 {dimension_numbers = #tpu.dot_dimension_numbers<[1], [0], [0], [1], [0, 0, 1, 1], [], []>} : vector<2x512xbf16>, vector<512x256xbf16>, vector<2x256xf32> -> vector<2x256xf32>
    %c0_9 = arith.constant 0 : index
    %c0_10 = arith.constant 0 : index
    %12 = vector.load %arg4[%c0_9, %c0_10] : memref<1x256xf32, #tpu.memory_space<vmem>>, vector<1x256xf32>
    %13 = vector.broadcast %12 : vector<1x256xf32> to vector<2x256xf32>
    %14 = arith.addf %11, %13 : vector<2x256xf32>
    %cst_11 = arith.constant dense<0.000000e+00> : vector<2xf32>
    %15 = vector.multi_reduction <add>, %14, %cst_11 [1] : vector<2x256xf32> to vector<2xf32>
    %16 = vector.shape_cast %15 : vector<2xf32> to vector<2x1xf32>
    %cst_12 = arith.constant 2.560000e+02 : f32
    %17 = vector.broadcast %cst_12 : f32 to vector<2x1xf32>
    %18 = arith.divf %16, %17 : vector<2x1xf32>
    %19 = vector.broadcast %18 : vector<2x1xf32> to vector<2x256xf32>
    %20 = arith.subf %14, %19 : vector<2x256xf32>
    %21 = arith.mulf %20, %20 : vector<2x256xf32>
    %cst_13 = arith.constant dense<0.000000e+00> : vector<2xf32>
    %22 = vector.multi_reduction <add>, %21, %cst_13 [1] : vector<2x256xf32> to vector<2xf32>
    %23 = vector.shape_cast %22 : vector<2xf32> to vector<2x1xf32>
    %cst_14 = arith.constant 2.560000e+02 : f32
    %24 = vector.broadcast %cst_14 : f32 to vector<2x1xf32>
    %25 = arith.divf %23, %24 : vector<2x1xf32>
    %26 = vector.broadcast %18 : vector<2x1xf32> to vector<2x256xf32>
    %27 = arith.subf %14, %26 : vector<2x256xf32>
    %cst_15 = arith.constant 9.99999974E-6 : f32
    %28 = vector.broadcast %cst_15 : f32 to vector<2x1xf32>
    %29 = arith.addf %25, %28 : vector<2x1xf32>
    %30 = math.rsqrt %29 : vector<2x1xf32>
    %31 = vector.broadcast %30 : vector<2x1xf32> to vector<2x256xf32>
    %32 = arith.mulf %27, %31 : vector<2x256xf32>
    %c0_16 = arith.constant 0 : index
    %c0_17 = arith.constant 0 : index
    %33 = vector.load %arg5[%c0_16, %c0_17] : memref<1x256xf32, #tpu.memory_space<vmem>>, vector<1x256xf32>
    %34 = vector.broadcast %33 : vector<1x256xf32> to vector<2x256xf32>
    %35 = arith.mulf %32, %34 : vector<2x256xf32>
    %c0_18 = arith.constant 0 : index
    %c0_19 = arith.constant 0 : index
    %36 = vector.load %arg6[%c0_18, %c0_19] : memref<1x256xf32, #tpu.memory_space<vmem>>, vector<1x256xf32>
    %37 = vector.broadcast %36 : vector<1x256xf32> to vector<2x256xf32>
    %38 = arith.addf %35, %37 : vector<2x256xf32>
    %39 = arith.truncf %38 : vector<2x256xf32> to vector<2x256xbf16>
    %c0_20 = arith.constant 0 : index
    %c0_21 = arith.constant 0 : index
    %40 = vector.load %arg7[%c0_20, %c0_21] : memref<256x128xbf16, #tpu.memory_space<vmem>>, vector<256x128xbf16>
    %cst_22 = arith.constant dense<0.000000e+00> : vector<2x128xf32>
    %41 = tpu.matmul %39, %40, %cst_22 {dimension_numbers = #tpu.dot_dimension_numbers<[1], [0], [0], [1], [0, 0, 1, 1], [], []>} : vector<2x256xbf16>, vector<256x128xbf16>, vector<2x128xf32> -> vector<2x128xf32>
    %c0_23 = arith.constant 0 : index
    %c0_24 = arith.constant 0 : index
    %42 = vector.load %arg8[%c0_23, %c0_24] : memref<1x128xf32, #tpu.memory_space<vmem>>, vector<1x128xf32>
    %43 = vector.broadcast %42 : vector<1x128xf32> to vector<2x128xf32>
    %44 = arith.addf %41, %43 : vector<2x128xf32>
    %cst_25 = arith.constant 0.000000e+00 : f32
    %45 = vector.broadcast %cst_25 : f32 to vector<2x128xf32>
    %46 = arith.maximumf %44, %45 : vector<2x128xf32>
    %47 = arith.truncf %46 : vector<2x128xf32> to vector<2x128xbf16>
    %c0_26 = arith.constant 0 : index
    %c0_27 = arith.constant 0 : index
    %48 = vector.load %arg9[%c0_26, %c0_27] : memref<128x128xbf16, #tpu.memory_space<vmem>>, vector<128x128xbf16>
    %cst_28 = arith.constant dense<0.000000e+00> : vector<2x128xf32>
    %49 = tpu.matmul %47, %48, %cst_28 {dimension_numbers = #tpu.dot_dimension_numbers<[1], [0], [0], [1], [0, 0, 1, 1], [], []>} : vector<2x128xbf16>, vector<128x128xbf16>, vector<2x128xf32> -> vector<2x128xf32>
    %c0_29 = arith.constant 0 : index
    %c0_30 = arith.constant 0 : index
    %50 = vector.load %arg10[%c0_29, %c0_30] : memref<1x128xf32, #tpu.memory_space<vmem>>, vector<1x128xf32>
    %51 = vector.broadcast %50 : vector<1x128xf32> to vector<2x128xf32>
    %52 = arith.addf %49, %51 : vector<2x128xf32>
    %53 = vector.extract_strided_slice %52 {offsets = [0, 0], sizes = [2, 8], strides = [1, 1]} : vector<2x128xf32> to vector<2x8xf32>
    %c0_31 = arith.constant 0 : index
    %c0_32 = arith.constant 0 : index
    %54 = vector.load %arg18[%c0_31, %c0_32] : memref<2x8xf32, #tpu.memory_space<vmem>>, vector<2x8xf32>
    tpu.vector_store %arg18[%c0_31, %c0_32], %53 {strides = array<i32>} : memref<2x8xf32, #tpu.memory_space<vmem>>, vector<2x8xf32>,
    %55 = arith.truncf %38 : vector<2x256xf32> to vector<2x256xbf16>
    %c0_33 = arith.constant 0 : index
    %c0_34 = arith.constant 0 : index
    %56 = vector.load %arg11[%c0_33, %c0_34] : memref<256x512xbf16, #tpu.memory_space<vmem>>, vector<256x512xbf16>
    %cst_35 = arith.constant dense<0.000000e+00> : vector<2x512xf32>
    %57 = tpu.matmul %55, %56, %cst_35 {dimension_numbers = #tpu.dot_dimension_numbers<[1], [0], [0], [1], [0, 0, 1, 1], [], []>} : vector<2x256xbf16>, vector<256x512xbf16>, vector<2x512xf32> -> vector<2x512xf32>
    %58 = arith.truncf %52 : vector<2x128xf32> to vector<2x128xbf16>
    %c0_36 = arith.constant 0 : index
    %c0_37 = arith.constant 0 : index
    %59 = vector.load %arg12[%c0_36, %c0_37] : memref<128x512xbf16, #tpu.memory_space<vmem>>, vector<128x512xbf16>
    %cst_38 = arith.constant dense<0.000000e+00> : vector<2x512xf32>
    %60 = tpu.matmul %58, %59, %cst_38 {dimension_numbers = #tpu.dot_dimension_numbers<[1], [0], [0], [1], [0, 0, 1, 1], [], []>} : vector<2x128xbf16>, vector<128x512xbf16>, vector<2x512xf32> -> vector<2x512xf32>
    %61 = arith.addf %57, %60 : vector<2x512xf32>
    %c0_39 = arith.constant 0 : index
    %c0_40 = arith.constant 0 : index
    %62 = vector.load %arg13[%c0_39, %c0_40] : memref<1x512xf32, #tpu.memory_space<vmem>>, vector<1x512xf32>
    %63 = vector.broadcast %62 : vector<1x512xf32> to vector<2x512xf32>
    %64 = arith.addf %61, %63 : vector<2x512xf32>
    %cst_41 = arith.constant 0.000000e+00 : f32
    %65 = vector.broadcast %cst_41 : f32 to vector<2x512xf32>
    %66 = arith.maximumf %64, %65 : vector<2x512xf32>
    %67 = arith.truncf %66 : vector<2x512xf32> to vector<2x512xbf16>
    %c0_42 = arith.constant 0 : index
    %c0_43 = arith.constant 0 : index
    %68 = vector.load %arg14[%c0_42, %c0_43] : memref<512x256xbf16, #tpu.memory_space<vmem>>, vector<512x256xbf16>
    %cst_44 = arith.constant dense<0.000000e+00> : vector<2x256xf32>
    %69 = tpu.matmul %67, %68, %cst_44 {dimension_numbers = #tpu.dot_dimension_numbers<[1], [0], [0], [1], [0, 0, 1, 1], [], []>} : vector<2x512xbf16>, vector<512x256xbf16>, vector<2x256xf32> -> vector<2x256xf32>
    %c0_45 = arith.constant 0 : index
    %c0_46 = arith.constant 0 : index
    %70 = vector.load %arg15[%c0_45, %c0_46] : memref<1x256xf32, #tpu.memory_space<vmem>>, vector<1x256xf32>
    %71 = vector.broadcast %70 : vector<1x256xf32> to vector<2x256xf32>
    %72 = arith.addf %69, %71 : vector<2x256xf32>
    %cst_47 = arith.constant 0.000000e+00 : f32
    %73 = vector.broadcast %cst_47 : f32 to vector<2x256xf32>
    %74 = arith.maximumf %72, %73 : vector<2x256xf32>
    %75 = arith.truncf %74 : vector<2x256xf32> to vector<2x256xbf16>
    %c0_48 = arith.constant 0 : index
    %c0_49 = arith.constant 0 : index
    %76 = vector.load %arg16[%c0_48, %c0_49] : memref<256x128xbf16, #tpu.memory_space<vmem>>, vector<256x128xbf16>
    %cst_50 = arith.constant dense<0.000000e+00> : vector<2x128xf32>
    %77 = tpu.matmul %75, %76, %cst_50 {dimension_numbers = #tpu.dot_dimension_numbers<[1], [0], [0], [1], [0, 0, 1, 1], [], []>} : vector<2x256xbf16>, vector<256x128xbf16>, vector<2x128xf32> -> vector<2x128xf32>
    %c0_51 = arith.constant 0 : index
    %c0_52 = arith.constant 0 : index
    %78 = vector.load %arg17[%c0_51, %c0_52] : memref<1x128xf32, #tpu.memory_space<vmem>>, vector<1x128xf32>
    %79 = vector.broadcast %78 : vector<1x128xf32> to vector<2x128xf32>
    %80 = arith.addf %77, %79 : vector<2x128xf32>
    %81 = vector.extract_strided_slice %80 {offsets = [0, 0], sizes = [2, 30], strides = [1, 1]} : vector<2x128xf32> to vector<2x30xf32>
    %c0_53 = arith.constant 0 : index
    %c0_54 = arith.constant 0 : index
    %82 = vector.load %arg19[%c0_53, %c0_54] : memref<2x30xf32, #tpu.memory_space<vmem>>, vector<2x30xf32>
    tpu.vector_store %arg19[%c0_53, %c0_54], %81 {strides = array<i32>} : memref<2x30xf32, #tpu.memory_space<vmem>>, vector<2x30xf32>,
    return
  }
}

</mosaic_0001>

<llo_original>
// kernel: qnet_forward.1
$region0: #{qnet_forward.1}
  #allocation0 [shape = 'u32[]', space=smem, size = 0x4, offset = 0x4, fixed_abs, tag = 'smem constant byte address 0x4 - core index']
  #allocation1 [shape = 'u32[144,128]{1,0:T(1,128)}', space=vmem, size = 0x12000, scoped, tag = 'internal scratch']
  %s0 = inlined_call_operand.vmem [shape: f32[2,160], index: 0, kind: input, shape index: {}]
  %s1 = inlined_call_operand.hbm [shape: bf16[160,512], index: 1, kind: input, shape index: {}]
  %s2 = inlined_call_operand.vmem [shape: f32[1,512], index: 2, kind: input, shape index: {}]
  %s3 = inlined_call_operand.hbm [shape: bf16[512,256], index: 3, kind: input, shape index: {}]
  %s4 = inlined_call_operand.vmem [shape: f32[1,256], index: 4, kind: input, shape index: {}]
  %s5 = inlined_call_operand.vmem [shape: f32[1,256], index: 5, kind: input, shape index: {}]
  %s6 = inlined_call_operand.vmem [shape: f32[1,256], index: 6, kind: input, shape index: {}]
  %s7 = inlined_call_operand.hbm [shape: bf16[256,128], index: 7, kind: input, shape index: {}]
  %s8 = inlined_call_operand.vmem [shape: f32[1,128], index: 8, kind: input, shape index: {}]
  %s9 = inlined_call_operand.hbm [shape: bf16[128,128], index: 9, kind: input, shape index: {}]
  %s10 = inlined_call_operand.vmem [shape: f32[1,128], index: 10, kind: input, shape index: {}]
  %s11 = inlined_call_operand.hbm [shape: bf16[256,512], index: 11, kind: input, shape index: {}]
  %s12 = inlined_call_operand.hbm [shape: bf16[128,512], index: 12, kind: input, shape index: {}]
  %s13 = inlined_call_operand.vmem [shape: f32[1,512], index: 13, kind: input, shape index: {}]
  %s14 = inlined_call_operand.hbm [shape: bf16[512,256], index: 14, kind: input, shape index: {}]
  %s15 = inlined_call_operand.vmem [shape: f32[1,256], index: 15, kind: input, shape index: {}]
  %s16 = inlined_call_operand.hbm [shape: bf16[256,128], index: 16, kind: input, shape index: {}]
  %s17 = inlined_call_operand.vmem [shape: f32[1,128], index: 17, kind: input, shape index: {}]
  %s18 = inlined_call_operand.hbm [shape: f32[2,8], index: 18, kind: output, shape index: {0}]
  %s19 = inlined_call_operand.hbm [shape: f32[2,30], index: 19, kind: output, shape index: {1}]
  %20 = xla_tuple %s18, %s19
  %s21 = sld [smem:[#allocation0]]
  $region122: #{qnet_forward.1} parent=0
    _
  %s23 = ssub.s32 1, %s21
  %s24 = scalar_select 0, %s23, %s21
  $region1: #{qnet_forward.1} parent=0
    #allocation2 [shape = 'u8[163840]{0}', space=vmem, size = 0x28000, scoped, tag = 'input window, operand 1, single buffered']
    #allocation3 [shape = 's32[1]{0}', space=sflag, size = 0x4, scoped, tag = 'scoped memory for qnet_forward.1']
    #allocation4 [shape = 's32[1]{0}', space=sflag, size = 0x4, scoped, tag = 'scoped memory for qnet_forward.1']
    #allocation5 [shape = 'u8[262144]{0}', space=vmem, size = 0x40000, scoped, tag = 'input window, operand 3, single buffered']
    #allocation6 [shape = 's32[1]{0}', space=sflag, size = 0x4, scoped, tag = 'scoped memory for qnet_forward.1']
    #allocation7 [shape = 'u8[65536]{0}', space=vmem, size = 0x10000, scoped, tag = 'input window, operand 7, single buffered']
    #allocation8 [shape = 'u8[32768]{0}', space=vmem, size = 0x8000, scoped, tag = 'input window, operand 9, single buffered']
    #allocation9 [shape = 's32[1]{0}', space=sflag, size = 0x4, scoped, tag = 'scoped memory for qnet_forward.1']
    #allocation10 [shape = 'u8[262144]{0}', space=vmem, size = 0x40000, scoped, tag = 'input window, operand 11, single buffered']
    #allocation11 [shape = 'u8[131072]{0}', space=vmem, size = 0x20000, scoped, tag = 'input window, operand 12, single buffered']
    #allocation12 [shape = 's32[1]{0}', space=sflag, size = 0x4, scoped, tag = 'scoped memory for qnet_forward.1']
    #allocation13 [shape = 'u8[262144]{0}', space=vmem, size = 0x40000, scoped, tag = 'input window, operand 14, single buffered']
    #allocation14 [shape = 'u8[65536]{0}', space=vmem, size = 0x10000, scoped, tag = 'input window, operand 16, single buffered']
    #allocation15 [shape = 's32[1]{0}', space=sflag, size = 0x4, scoped, tag = 'scoped memory for qnet_forward.1']
    #allocation16 [shape = 'u8[1024]{0}', space=vmem, size = 0x400, scoped, tag = 'output window, operand 0, single buffered']
    #allocation17 [shape = 'u8[1024]{0}', space=vmem, size = 0x400, scoped, tag = 'output window, operand 1, single buffered']
    #allocation18 [shape = 's32[1]{0}', space=sflag, size = 0x4, scoped, tag = 'scoped memory for qnet_forward.1']
    %25 = vsyncpa [#allocation3], 0
    %26 = vsyncpa [#allocation6], 0
    %27 = vsyncpa [#allocation9], 0
    %28 = vsyncpa [#allocation12], 0
    %29 = vsyncpa [#allocation15], 0
    %30 = vsyncpa [#allocation4], 0
    %31 = vsyncpa [#allocation18], 0
    // Predicated region
    $region2: #{qnet_forward.1} parent=1 // pred_check
      _
    $region3: #{qnet_forward.1} parent=1 // pred_check_branch
      %33 = sbr.rel (0) target = $region5
    $region4: #{qnet_forward.1} parent=1 // pred_region
      _
    $region5: #{qnet_forward.1} parent=1 // pred_fallthru
      _
    // Predicated region
    $region6: #{qnet_forward.1} parent=1 // pred_check
      _
    $region7: #{qnet_forward.1} parent=1 // pred_check_branch
      %35 = sbr.rel (0) target = $region9
    $region8: #{qnet_forward.1} parent=1 // pred_region
      %s37 = ssub.s32 5120, 5120
      %38 = vsyncadd [#allocation3], %s37
      %s39 = sshll.u32 [#allocation2], 4
      %s40 = int_to_ptr.vmem [resolvable:$true] %s39
      %45 = dma.hbm_to_vmem [thread:$0]  %s1, 5120, %s40, [#allocation3], 256, 256, 16
    $region9: #{qnet_forward.1} parent=1 // pred_fallthru
      _
    // Predicated region
    $region10: #{qnet_forward.1} parent=1 // pred_check
      _
    $region11: #{qnet_forward.1} parent=1 // pred_check_branch
      %47 = sbr.rel (0) target = $region13
    $region12: #{qnet_forward.1} parent=1 // pred_region
      _
    $region13: #{qnet_forward.1} parent=1 // pred_fallthru
      _
    // Predicated region
    $region14: #{qnet_forward.1} parent=1 // pred_check
      _
    $region15: #{qnet_forward.1} parent=1 // pred_check_branch
      %49 = sbr.rel (0) target = $region17
    $region16: #{qnet_forward.1} parent=1 // pred_region
      %s51 = ssub.s32 8192, 8192
      %52 = vsyncadd [#allocation6], %s51
      %s53 = sshll.u32 [#allocation5], 4
      %s54 = int_to_ptr.vmem [resolvable:$true] %s53
      %59 = dma.hbm_to_vmem [thread:$0]  %s3, 8192, %s54, [#allocation6], 128, 128, 8
    $region17: #{qnet_forward.1} parent=1 // pred_fallthru
      _
    // Predicated region
    $region18: #{qnet_forward.1} parent=1 // pred_check
      _
    $region19: #{qnet_forward.1} parent=1 // pred_check_branch
      %61 = sbr.rel (0) target = $region21
    $region20: #{qnet_forward.1} parent=1 // pred_region
      _
    $region21: #{qnet_forward.1} parent=1 // pred_fallthru
      _
    // Predicated region
    $region22: #{qnet_forward.1} parent=1 // pred_check
      _
    $region23: #{qnet_forward.1} parent=1 // pred_check_branch
      %63 = sbr.rel (0) target = $region25
    $region24: #{qnet_forward.1} parent=1 // pred_region
      _
    $region25: #{qnet_forward.1} parent=1 // pred_fallthru
      _
    // Predicated region
    $region26: #{qnet_forward.1} parent=1 // pred_check
      _
    $region27: #{qnet_forward.1} parent=1 // pred_check_branch
      %65 = sbr.rel (0) target = $region29
    $region28: #{qnet_forward.1} parent=1 // pred_region
      _
    $region29: #{qnet_forward.1} parent=1 // pred_fallthru
      _
    // Predicated region
    $region30: #{qnet_forward.1} parent=1 // pred_check
      _
    $region31: #{qnet_forward.1} parent=1 // pred_check_branch
      %67 = sbr.rel (0) target = $region33
    $region32: #{qnet_forward.1} parent=1 // pred_region
      %s69 = ssub.s32 2048, 2048
      %70 = vsyncadd [#allocation6], %s69
      %s71 = sshll.u32 [#allocation7], 4
      %s72 = int_to_ptr.vmem [resolvable:$true] %s71
      %77 = dma.hbm_to_vmem [thread:$0]  %s7, 2048, %s72, [#allocation6], 64, 64, 4
    $region33: #{qnet_forward.1} parent=1 // pred_fallthru
      _
    // Predicated region
    $region34: #{qnet_forward.1} parent=1 // pred_check
      _
    $region35: #{qnet_forward.1} parent=1 // pred_check_branch
      %79 = sbr.rel (0) target = $region37
    $region36: #{qnet_forward.1} parent=1 // pred_region
      _
    $region37: #{qnet_forward.1} parent=1 // pred_fallthru
      _
    // Predicated region
    $region38: #{qnet_forward.1} parent=1 // pred_check
      _
    $region39: #{qnet_forward.1} parent=1 // pred_check_branch
      %81 = sbr.rel (0) target = $region41
    $region40: #{qnet_forward.1} parent=1 // pred_region
      %s83 = ssub.s32 1024, 1024
      %84 = vsyncadd [#allocation9], %s83
      %s85 = sshll.u32 [#allocation8], 4
      %s86 = int_to_ptr.vmem [resolvable:$true] %s85
      %91 = dma.hbm_to_vmem [thread:$0]  %s9, 1024, %s86, [#allocation9], 64, 64, 4
    $region41: #{qnet_forward.1} parent=1 // pred_fallthru
      _
    // Predicated region
    $region42: #{qnet_forward.1} parent=1 // pred_check
      _
    $region43: #{qnet_forward.1} parent=1 // pred_check_branch
      %93 = sbr.rel (0) target = $region45
    $region44: #{qnet_forward.1} parent=1 // pred_region
      _
    $region45: #{qnet_forward.1} parent=1 // pred_fallthru
      _
    // Predicated region
    $region46: #{qnet_forward.1} parent=1 // pred_check
      _
    $region47: #{qnet_forward.1} parent=1 // pred_check_branch
      %95 = sbr.rel (0) target = $region49
    $region48: #{qnet_forward.1} parent=1 // pred_region
      %s97 = ssub.s32 8192, 8192
      %98 = vsyncadd [#allocation9], %s97
      %s99 = sshll.u32 [#allocation10], 4
      %s100 = int_to_ptr.vmem [resolvable:$true] %s99
      %105 = dma.hbm_to_vmem [thread:$0]  %s11, 8192, %s100, [#allocation9], 256, 256, 16
    $region49: #{qnet_forward.1} parent=1 // pred_fallthru
      _
    // Predicated region
    $region50: #{qnet_forward.1} parent=1 // pred_check
      _
    $region51: #{qnet_forward.1} parent=1 // pred_check_branch
      %107 = sbr.rel (0) target = $region53
    $region52: #{qnet_forward.1} parent=1 // pred_region
      %s109 = ssub.s32 4096, 4096
      %110 = vsyncadd [#allocation12], %s109
      %s111 = sshll.u32 [#allocation11], 4
      %s112 = int_to_ptr.vmem [resolvable:$true] %s111
      %117 = dma.hbm_to_vmem [thread:$0]  %s12, 4096, %s112, [#allocation12], 256, 256, 16
    $region53: #{qnet_forward.1} parent=1 // pred_fallthru
      _
    // Predicated region
    $region54: #{qnet_forward.1} parent=1 // pred_check
      _
    $region55: #{qnet_forward.1} parent=1 // pred_check_branch
      %119 = sbr.rel (0) target = $region57
    $region56: #{qnet_forward.1} parent=1 // pred_region
      _
    $region57: #{qnet_forward.1} parent=1 // pred_fallthru
      _
    // Predicated region
    $region58: #{qnet_forward.1} parent=1 // pred_check
      _
    $region59: #{qnet_forward.1} parent=1 // pred_check_branch
      %121 = sbr.rel (0) target = $region61
    $region60: #{qnet_forward.1} parent=1 // pred_region
      %s123 = ssub.s32 8192, 8192
      %124 = vsyncadd [#allocation12], %s123
      %s125 = sshll.u32 [#allocation13], 4
      %s126 = int_to_ptr.vmem [resolvable:$true] %s125
      %131 = dma.hbm_to_vmem [thread:$0]  %s14, 8192, %s126, [#allocation12], 128, 128, 8
    $region61: #{qnet_forward.1} parent=1 // pred_fallthru
      _
    // Predicated region
    $region62: #{qnet_forward.1} parent=1 // pred_check
      _
    $region63: #{qnet_forward.1} parent=1 // pred_check_branch
      %133 = sbr.rel (0) target = $region65
    $region64: #{qnet_forward.1} parent=1 // pred_region
      _
    $region65: #{qnet_forward.1} parent=1 // pred_fallthru
      _
    // Predicated region
    $region66: #{qnet_forward.1} parent=1 // pred_check
      _
    $region67: #{qnet_forward.1} parent=1 // pred_check_branch
      %135 = sbr.rel (0) target = $region69
    $region68: #{qnet_forward.1} parent=1 // pred_region
      %s137 = ssub.s32 2048, 2048
      %138 = vsyncadd [#allocation15], %s137
      %s139 = sshll.u32 [#allocation14], 4
      %s140 = int_to_ptr.vmem [resolvable:$true] %s139
      %145 = dma.hbm_to_vmem [thread:$0]  %s16, 2048, %s140, [#allocation15], 64, 64, 4
    $region69: #{qnet_forward.1} parent=1 // pred_fallthru
      _
    // Predicated region
    $region70: #{qnet_forward.1} parent=1 // pred_check
      _
    $region71: #{qnet_forward.1} parent=1 // pred_check_branch
      %147 = sbr.rel (0) target = $region73
    $region72: #{qnet_forward.1} parent=1 // pred_region
      _
    $region73: #{qnet_forward.1} parent=1 // pred_fallthru
      _
    // Predicated region
    $region74: #{qnet_forward.1} parent=1 // pred_check
      _
    $region75: #{qnet_forward.1} parent=1 // pred_check_branch
      %149 = sbr.rel (0) target = $region77
    $region76: #{qnet_forward.1} parent=1 // pred_region
      %150 = dma.done [#allocation3], 5120
    $region77: #{qnet_forward.1} parent=1 // pred_fallthru
      _
    // Predicated region
    $region78: #{qnet_forward.1} parent=1 // pred_check
      _
    $region79: #{qnet_forward.1} parent=1 // pred_check_branch
      %152 = sbr.rel (0) target = $region81
    $region80: #{qnet_forward.1} parent=1 // pred_region
      %153 = dma.done [#allocation6], 8192
    $region81: #{qnet_forward.1} parent=1 // pred_fallthru
      _
    // Predicated region
    $region82: #{qnet_forward.1} parent=1 // pred_check
      _
    $region83: #{qnet_forward.1} parent=1 // pred_check_branch
      %155 = sbr.rel (0) target = $region85
    $region84: #{qnet_forward.1} parent=1 // pred_region
      %156 = dma.done [#allocation6], 2048
    $region85: #{qnet_forward.1} parent=1 // pred_fallthru
      _
    // Predicated region
    $region86: #{qnet_forward.1} parent=1 // pred_check
      _
    $region87: #{qnet_forward.1} parent=1 // pred_check_branch
      %158 = sbr.rel (0) target = $region89
    $region88: #{qnet_forward.1} parent=1 // pred_region
      %159 = dma.done [#allocation9], 1024
    $region89: #{qnet_forward.1} parent=1 // pred_fallthru
      _
    // Predicated region
    $region90: #{qnet_forward.1} parent=1 // pred_check
      _
    $region91: #{qnet_forward.1} parent=1 // pred_check_branch
      %161 = sbr.rel (0) target = $region93
    $region92: #{qnet_forward.1} parent=1 // pred_region
      %162 = dma.done [#allocation9], 8192
    $region93: #{qnet_forward.1} parent=1 // pred_fallthru
      _
    // Predicated region
    $region94: #{qnet_forward.1} parent=1 // pred_check
      _
    $region95: #{qnet_forward.1} parent=1 // pred_check_branch
      %164 = sbr.rel (0) target = $region97
    $region96: #{qnet_forward.1} parent=1 // pred_region
      %165 = dma.done [#allocation12], 4096
    $region97: #{qnet_forward.1} parent=1 // pred_fallthru
      _
    // Predicated region
    $region98: #{qnet_forward.1} parent=1 // pred_check
      _
    $region99: #{qnet_forward.1} parent=1 // pred_check_branch
      %167 = sbr.rel (0) target = $region101
    $region100: #{qnet_forward.1} parent=1 // pred_region
      %168 = dma.done [#allocation12], 8192
    $region101: #{qnet_forward.1} parent=1 // pred_fallthru
      _
    // Predicated region
    $region102: #{qnet_forward.1} parent=1 // pred_check
      _
    $region103: #{qnet_forward.1} parent=1 // pred_check_branch
      %170 = sbr.rel (0) target = $region105
    $region104: #{qnet_forward.1} parent=1 // pred_region
      %171 = dma.done [#allocation15], 2048
    $region105: #{qnet_forward.1} parent=1 // pred_fallthru
      _
    %v173 = vld [vmem:[%s0] sm:$0xf]
    %v176 = vunpack.c.l.s4 1983009808
    %v177 = vunpack.c.0.s8 %v176
    %v178 = vlaneseq
    %v179 = vshrl.u32 %v178, 7
    %v180 = vsub.s32 %v177, %v179
    %v181 = vrot.slane %v173, %v180
    %v182 = vcombine.high %v181, %v181
    %v185 = vpack.c.bf16 %v181, %v181
    %v186 = vpack.c.bf16 %v182, %v182
    %v187 = vld [vmem:[#allocation2] sm:$0xff]
    %v188 = vld [vmem:[#allocation2 + $0x8] sm:$0xff]
    %v189 = vld [vmem:[#allocation2 + $0x10] sm:$0xff]
    %v190 = vld [vmem:[#allocation2 + $0x18] sm:$0xff]
    %v191 = vld [vmem:[#allocation2 + $0x20] sm:$0xff]
    %v192 = vld [vmem:[#allocation2 + $0x28] sm:$0xff]
    %v193 = vld [vmem:[#allocation2 + $0x30] sm:$0xff]
    %v194 = vld [vmem:[#allocation2 + $0x38] sm:$0xff]
    %v195 = vld [vmem:[#allocation2 + $0x40] sm:$0xff]
    %v196 = vld [vmem:[#allocation2 + $0x48] sm:$0xff]
    %v197 = vld [vmem:[#allocation2 + $0x50] sm:$0xff]
    %v198 = vld [vmem:[#allocation2 + $0x58] sm:$0xff]
    %v199 = vld [vmem:[#allocation2 + $0x60] sm:$0xff]
    %v200 = vld [vmem:[#allocation2 + $0x68] sm:$0xff]
    %v201 = vld [vmem:[#allocation2 + $0x70] sm:$0xff]
    %v202 = vld [vmem:[#allocation2 + $0x78] sm:$0xff]
    %v203 = vld [vmem:[#allocation2 + $0x80] sm:$0xff]
    %v204 = vld [vmem:[#allocation2 + $0x88] sm:$0xff]
    %v205 = vld [vmem:[#allocation2 + $0x90] sm:$0xff]
    %v206 = vld [vmem:[#allocation2 + $0x98] sm:$0xff]
    %v207 = vld [vmem:[#allocation2 + $0xa0] sm:$0xff]
    %v208 = vld [vmem:[#allocation2 + $0xa8] sm:$0xff]
    %v209 = vld [vmem:[#allocation2 + $0xb0] sm:$0xff]
    %v210 = vld [vmem:[#allocation2 + $0xb8] sm:$0xff]
    %v211 = vld [vmem:[#allocation2 + $0xc0] sm:$0xff]
    %v212 = vld [vmem:[#allocation2 + $0xc8] sm:$0xff]
    %v213 = vld [vmem:[#allocation2 + $0xd0] sm:$0xff]
    %v214 = vld [vmem:[#allocation2 + $0xd8] sm:$0xff]
    %v215 = vld [vmem:[#allocation2 + $0xe0] sm:$0xff]
    %v216 = vld [vmem:[#allocation2 + $0xe8] sm:$0xff]
    %v217 = vld [vmem:[#allocation2 + $0xf0] sm:$0xff]
    %v218 = vld [vmem:[#allocation2 + $0xf8] sm:$0xff]
    %v219 = vld [vmem:[#allocation2 + $0x100] sm:$0xff]
    %v220 = vld [vmem:[#allocation2 + $0x108] sm:$0xff]
    %v221 = vld [vmem:[#allocation2 + $0x110] sm:$0xff]
    %v222 = vld [vmem:[#allocation2 + $0x118] sm:$0xff]
    %v223 = vld [vmem:[#allocation2 + $0x120] sm:$0xff]
    %v224 = vld [vmem:[#allocation2 + $0x128] sm:$0xff]
    %v225 = vld [vmem:[#allocation2 + $0x130] sm:$0xff]
    %v226 = vld [vmem:[#allocation2 + $0x138] sm:$0xff]
    %v227 = vld [vmem:[%s2] sm:$0xf]
    %v229 = vlaneseq
    %v230 = vshrl.u32 %v229, 7
    %v231 = vsub.s32 0, %v230
    %v232 = vrot.slane %v227, %v231
    %v233 = vlaneseq
    %v234 = vshrl.u32 %v233, 7
    %v235 = vsub.s32 1, %v234
    %v236 = vrot.slane %v227, %v235
    %v237 = vlaneseq
    %v238 = vshrl.u32 %v237, 7
    %v239 = vsub.s32 2, %v238
    %v240 = vrot.slane %v227, %v239
    %v241 = vlaneseq
    %v242 = vshrl.u32 %v241, 7
    %v243 = vsub.s32 3, %v242
    %v244 = vrot.slane %v227, %v243
    %v289 = vunpack.c.l.b16 %v187
    %v290 = vunpack.c.h.b16 %v187
    %v291 = vunpack.c.l.b16 %v188
    %v292 = vunpack.c.h.b16 %v188
    %v293 = vunpack.c.l.b16 %v189
    %v294 = vunpack.c.h.b16 %v189
    %v295 = vunpack.c.l.b16 %v190
    %v296 = vunpack.c.h.b16 %v190
    %v297 = vunpack.c.l.b16 %v191
    %v298 = vunpack.c.h.b16 %v191
    %v299 = vunpack.c.l.b16 %v192
    %v300 = vunpack.c.h.b16 %v192
    %v301 = vunpack.c.l.b16 %v193
    %v302 = vunpack.c.h.b16 %v193
    %v303 = vunpack.c.l.b16 %v194
    %v304 = vunpack.c.h.b16 %v194
    %v305 = vunpack.c.l.b16 %v195
    %v306 = vunpack.c.h.b16 %v195
    %v307 = vunpack.c.l.b16 %v196
    %v308 = vunpack.c.h.b16 %v196
    %v309 = vunpack.c.l.b16 %v197
    %v310 = vunpack.c.h.b16 %v197
    %v311 = vunpack.c.l.b16 %v198
    %v312 = vunpack.c.h.b16 %v198
    %v313 = vunpack.c.l.b16 %v199
    %v314 = vunpack.c.h.b16 %v199
    %v315 = vunpack.c.l.b16 %v200
    %v316 = vunpack.c.h.b16 %v200
    %v317 = vunpack.c.l.b16 %v201
    %v318 = vunpack.c.h.b16 %v201
    %v319 = vunpack.c.l.b16 %v202
    %v320 = vunpack.c.h.b16 %v202
    %v321 = vunpack.c.l.b16 %v203
    %v322 = vunpack.c.h.b16 %v203
    %v323 = vunpack.c.l.b16 %v204
    %v324 = vunpack.c.h.b16 %v204
    %v325 = vunpack.c.l.b16 %v205
    %v326 = vunpack.c.h.b16 %v205
    %v327 = vunpack.c.l.b16 %v206
    %v328 = vunpack.c.h.b16 %v206
    %v329 = vunpack.c.l.b16 %v207
    %v330 = vunpack.c.h.b16 %v207
    %v331 = vunpack.c.l.b16 %v208
    %v332 = vunpack.c.h.b16 %v208
    %v333 = vunpack.c.l.b16 %v209
    %v334 = vunpack.c.h.b16 %v209
    %v335 = vunpack.c.l.b16 %v210
    %v336 = vunpack.c.h.b16 %v210
    %v337 = vunpack.c.l.b16 %v211
    %v338 = vunpack.c.h.b16 %v211
    %v339 = vunpack.c.l.b16 %v212
    %v340 = vunpack.c.h.b16 %v212
    %v341 = vunpack.c.l.b16 %v213
    %v342 = vunpack.c.h.b16 %v213
    %v343 = vunpack.c.l.b16 %v214
    %v344 = vunpack.c.h.b16 %v214
    %v345 = vunpack.c.l.b16 %v215
    %v346 = vunpack.c.h.b16 %v215
    %v347 = vunpack.c.l.b16 %v216
    %v348 = vunpack.c.h.b16 %v216
    %v349 = vunpack.c.l.b16 %v217
    %v350 = vunpack.c.h.b16 %v217
    %v351 = vunpack.c.l.b16 %v218
    %v352 = vunpack.c.h.b16 %v218
    %v353 = vunpack.c.l.b16 %v219
    %v354 = vunpack.c.h.b16 %v219
    %v355 = vunpack.c.l.b16 %v220
    %v356 = vunpack.c.h.b16 %v220
    %v357 = vunpack.c.l.b16 %v221
    %v358 = vunpack.c.h.b16 %v221
    %v359 = vunpack.c.l.b16 %v222
    %v360 = vunpack.c.h.b16 %v222
    %v361 = vunpack.c.l.b16 %v223
    %v362 = vunpack.c.h.b16 %v223
    %v363 = vunpack.c.l.b16 %v224
    %v364 = vunpack.c.h.b16 %v224
    %v365 = vunpack.c.l.b16 %v225
    %v366 = vunpack.c.h.b16 %v225
    %v367 = vunpack.c.l.b16 %v226
    %v368 = vunpack.c.h.b16 %v226
    %v369 = vpack.c.b16 %v293, %v289
    %v370 = vpack.c.b16 %v294, %v290
    %v371 = vpack.c.b16 %v295, %v291
    %v372 = vpack.c.b16 %v296, %v292
    %v373 = vpack.c.b16 %v301, %v297
    %v374 = vpack.c.b16 %v302, %v298
    %v375 = vpack.c.b16 %v303, %v299
    %v376 = vpack.c.b16 %v304, %v300
    %v377 = vpack.c.b16 %v309, %v305
    %v378 = vpack.c.b16 %v310, %v306
    %v379 = vpack.c.b16 %v311, %v307
    %v380 = vpack.c.b16 %v312, %v308
    %v381 = vpack.c.b16 %v317, %v313
    %v382 = vpack.c.b16 %v318, %v314
    %v383 = vpack.c.b16 %v319, %v315
    %v384 = vpack.c.b16 %v320, %v316
    %v385 = vpack.c.b16 %v325, %v321
    %v386 = vpack.c.b16 %v326, %v322
    %v387 = vpack.c.b16 %v327, %v323
    %v388 = vpack.c.b16 %v328, %v324
    %v389 = vpack.c.b16 %v333, %v329
    %v390 = vpack.c.b16 %v334, %v330
    %v391 = vpack.c.b16 %v335, %v331
    %v392 = vpack.c.b16 %v336, %v332
    %v393 = vpack.c.b16 %v341, %v337
    %v394 = vpack.c.b16 %v342, %v338
    %v395 = vpack.c.b16 %v343, %v339
    %v396 = vpack.c.b16 %v344, %v340
    %v397 = vpack.c.b16 %v349, %v345
    %v398 = vpack.c.b16 %v350, %v346
    %v399 = vpack.c.b16 %v351, %v347
    %v400 = vpack.c.b16 %v352, %v348
    %v401 = vpack.c.b16 %v357, %v353
    %v402 = vpack.c.b16 %v358, %v354
    %v403 = vpack.c.b16 %v359, %v355
    %v404 = vpack.c.b16 %v360, %v356
    %v405 = vpack.c.b16 %v365, %v361
    %v406 = vpack.c.b16 %v366, %v362
    %v407 = vpack.c.b16 %v367, %v363
    %v408 = vpack.c.b16 %v368, %v364
    %vm449 = vcmask 261120
    %v451 = vsel %vm449, %v186, 0
    %453 = vmatprep.subr.bf16.mxu0 %v398
    %454 = vmatpush1.bf16.msra.mxu0 %v397
    %455 = vmatprep.subr.bf16.mxu0 %v394
    %456 = vmatpush1.bf16.msra.mxu0 %v393
    %457 = vmatprep.subr.bf16.mxu0 %v390
    %458 = vmatpush1.bf16.msra.mxu0 %v389
    %459 = vmatprep.subr.bf16.mxu0 %v386
    %460 = vmatpush1.bf16.msra.mxu0 %v385
    %461 = vmatprep.subr.bf16.mxu0 %v382
    %462 = vmatpush1.bf16.msra.mxu0 %v381
    %463 = vmatprep.subr.bf16.mxu0 %v378
    %464 = vmatpush1.bf16.msra.mxu0 %v377
    %465 = vmatprep.subr.bf16.mxu0 %v374
    %466 = vmatpush1.bf16.msra.mxu0 %v373
    %467 = vmatprep.subr.bf16.mxu0 %v370
    %468 = vmatpush1.bf16.msra.mxu0 %v369
    %469 = vmatprep.subr.bf16.mxu0 0
    %470 = vmatpush2.bf16.msra.mxu0 0
    %471 = vmatprep.subr.bf16.mxu0 0
    %472 = vmatpush2.bf16.msra.mxu0 0
    %473 = vmatprep.subr.bf16.mxu0 0
    %474 = vmatpush2.bf16.msra.mxu0 0
    %475 = vmatprep.subr.bf16.mxu0 0
    %476 = vmatpush2.bf16.msra.mxu0 0
    %477 = vmatprep.subr.bf16.mxu0 0
    %478 = vmatpush2.bf16.msra.mxu0 0
    %479 = vmatprep.subr.bf16.mxu0 0
    %480 = vmatpush2.bf16.msra.mxu0 0
    %481 = vmatprep.subr.bf16.mxu0 %v406
    %482 = vmatpush2.bf16.msra.mxu0 %v405
    %483 = vmatprep.subr.bf16.mxu0 %v402
    %484 = vmatpush2.bf16.msra.mxu0 %v401
    %485 = vmatprep.mubr.bf16.mxu0 %v451
    %486 = vmatmul.mubr.bf16.gmra.mxu0 %v185
    %v487 = vpop.f32.mrf.mxu0
    %v488 = vadd.f32 %v232, %v487
    %v489 = vpop.f32.mrf.mxu0
    %v490 = vadd.f32 %v236, %v489
    %v491 = vpop.f32.mrf.mxu0
    %v492 = vpop.f32.mrf.mxu0
    %493 = vdwg.mxu0
    %494 = vmatprep.subr.bf16.mxu0 %v400
    %495 = vmatpush1.bf16.msra.mxu0 %v399
    %496 = vmatprep.subr.bf16.mxu0 %v396
    %497 = vmatpush1.bf16.msra.mxu0 %v395
    %498 = vmatprep.subr.bf16.mxu0 %v392
    %499 = vmatpush1.bf16.msra.mxu0 %v391
    %500 = vmatprep.subr.bf16.mxu0 %v388
    %501 = vmatpush1.bf16.msra.mxu0 %v387
    %502 = vmatprep.subr.bf16.mxu0 %v384
    %503 = vmatpush1.bf16.msra.mxu0 %v383
    %504 = vmatprep.subr.bf16.mxu0 %v380
    %505 = vmatpush1.bf16.msra.mxu0 %v379
    %506 = vmatprep.subr.bf16.mxu0 %v376
    %507 = vmatpush1.bf16.msra.mxu0 %v375
    %508 = vmatprep.subr.bf16.mxu0 %v372
    %509 = vmatpush1.bf16.msra.mxu0 %v371
    %510 = vmatprep.subr.bf16.mxu0 0
    %511 = vmatpush2.bf16.msra.mxu0 0
    %512 = vmatprep.subr.bf16.mxu0 0
    %513 = vmatpush2.bf16.msra.mxu0 0
    %514 = vmatprep.subr.bf16.mxu0 0
    %515 = vmatpush2.bf16.msra.mxu0 0
    %516 = vmatprep.subr.bf16.mxu0 0
    %517 = vmatpush2.bf16.msra.mxu0 0
    %518 = vmatprep.subr.bf16.mxu0 0
    %519 = vmatpush2.bf16.msra.mxu0 0
    %520 = vmatprep.subr.bf16.mxu0 0
    %521 = vmatpush2.bf16.msra.mxu0 0
    %522 = vmatprep.subr.bf16.mxu0 %v408
    %523 = vmatpush2.bf16.msra.mxu0 %v407
    %524 = vmatprep.subr.bf16.mxu0 %v404
    %525 = vmatpush2.bf16.msra.mxu0 %v403
    %526 = vmatprep.mubr.bf16.mxu0 %v451
    %527 = vmatmul.mubr.bf16.gmra.mxu0 %v185
    %v528 = vpop.f32.mrf.mxu0
    %v529 = vadd.f32 %v240, %v528
    %v530 = vpop.f32.mrf.mxu0
    %v531 = vadd.f32 %v244, %v530
    %v532 = vpop.f32.mrf.mxu0
    %v533 = vpop.f32.mrf.mxu0
    %534 = vdwg.mxu0
    %v535 = vmax.f32 %v488, 0.0
    %v536 = vmax.f32 %v490, 0.0
    %v537 = vmax.f32 %v529, 0.0
    %v538 = vmax.f32 %v531, 0.0
    %v539 = vpack.c.bf16 %v535, %v535
    %v540 = vpack.c.bf16 %v536, %v536
    %v541 = vpack.c.bf16 %v537, %v537
    %v542 = vpack.c.bf16 %v538, %v538
    %v543 = vld [vmem:[#allocation5] sm:$0xff]
    %v544 = vld [vmem:[#allocation5 + $0x8] sm:$0xff]
    %v545 = vld [vmem:[#allocation5 + $0x10] sm:$0xff]
    %v546 = vld [vmem:[#allocation5 + $0x18] sm:$0xff]
    %v547 = vld [vmem:[#allocation5 + $0x20] sm:$0xff]
    %v548 = vld [vmem:[#allocation5 + $0x28] sm:$0xff]
    %v549 = vld [vmem:[#allocation5 + $0x30] sm:$0xff]
    %v550 = vld [vmem:[#allocation5 + $0x38] sm:$0xff]
    %v551 = vld [vmem:[#allocation5 + $0x40] sm:$0xff]
    %v552 = vld [vmem:[#allocation5 + $0x48] sm:$0xff]
    %v553 = vld [vmem:[#allocation5 + $0x50] sm:$0xff]
    %v554 = vld [vmem:[#allocation5 + $0x58] sm:$0xff]
    %v555 = vld [vmem:[#allocation5 + $0x60] sm:$0xff]
    %v556 = vld [vmem:[#allocation5 + $0x68] sm:$0xff]
    %v557 = vld [vmem:[#allocation5 + $0x70] sm:$0xff]
    %v558 = vld [vmem:[#allocation5 + $0x78] sm:$0xff]
    %v559 = vld [vmem:[#allocation5 + $0x80] sm:$0xff]
    %v560 = vld [vmem:[#allocation5 + $0x88] sm:$0xff]
    %v561 = vld [vmem:[#allocation5 + $0x90] sm:$0xff]
    %v562 = vld [vmem:[#allocation5 + $0x98] sm:$0xff]
    %v563 = vld [vmem:[#allocation5 + $0xa0] sm:$0xff]
    %v564 = vld [vmem:[#allocation5 + $0xa8] sm:$0xff]
    %v565 = vld [vmem:[#allocation5 + $0xb0] sm:$0xff]
    %v566 = vld [vmem:[#allocation5 + $0xb8] sm:$0xff]
    %v567 = vld [vmem:[#allocation5 + $0xc0] sm:$0xff]
    %v568 = vld [vmem:[#allocation5 + $0xc8] sm:$0xff]
    %v569 = vld [vmem:[#allocation5 + $0xd0] sm:$0xff]
    %v570 = vld [vmem:[#allocation5 + $0xd8] sm:$0xff]
    %v571 = vld [vmem:[#allocation5 + $0xe0] sm:$0xff]
    %v572 = vld [vmem:[#allocation5 + $0xe8] sm:$0xff]
    %v573 = vld [vmem:[#allocation5 + $0xf0] sm:$0xff]
    %v574 = vld [vmem:[#allocation5 + $0xf8] sm:$0xff]
    %v575 = vld [vmem:[#allocation5 + $0x100] sm:$0xff]
    %v576 = vld [vmem:[#allocation5 + $0x108] sm:$0xff]
    %v577 = vld [vmem:[#allocation5 + $0x110] sm:$0xff]
    %v578 = vld [vmem:[#allocation5 + $0x118] sm:$0xff]
    %v579 = vld [vmem:[#allocation5 + $0x120] sm:$0xff]
    %v580 = vld [vmem:[#allocation5 + $0x128] sm:$0xff]
    %v581 = vld [vmem:[#allocation5 + $0x130] sm:$0xff]
    %v582 = vld [vmem:[#allocation5 + $0x138] sm:$0xff]
    %v583 = vld [vmem:[#allocation5 + $0x140] sm:$0xff]
    %v584 = vld [vmem:[#allocation5 + $0x148] sm:$0xff]
    %v585 = vld [vmem:[#allocation5 + $0x150] sm:$0xff]
    %v586 = vld [vmem:[#allocation5 + $0x158] sm:$0xff]
    %v587 = vld [vmem:[#allocation5 + $0x160] sm:$0xff]
    %v588 = vld [vmem:[#allocation5 + $0x168] sm:$0xff]
    %v589 = vld [vmem:[#allocation5 + $0x170] sm:$0xff]
    %v590 = vld [vmem:[#allocation5 + $0x178] sm:$0xff]
    %v591 = vld [vmem:[#allocation5 + $0x180] sm:$0xff]
    %v592 = vld [vmem:[#allocation5 + $0x188] sm:$0xff]
    %v593 = vld [vmem:[#allocation5 + $0x190] sm:$0xff]
    %v594 = vld [vmem:[#allocation5 + $0x198] sm:$0xff]
    %v595 = vld [vmem:[#allocation5 + $0x1a0] sm:$0xff]
    %v596 = vld [vmem:[#allocation5 + $0x1a8] sm:$0xff]
    %v597 = vld [vmem:[#allocation5 + $0x1b0] sm:$0xff]
    %v598 = vld [vmem:[#allocation5 + $0x1b8] sm:$0xff]
    %v599 = vld [vmem:[#allocation5 + $0x1c0] sm:$0xff]
    %v600 = vld [vmem:[#allocation5 + $0x1c8] sm:$0xff]
    %v601 = vld [vmem:[#allocation5 + $0x1d0] sm:$0xff]
    %v602 = vld [vmem:[#allocation5 + $0x1d8] sm:$0xff]
    %v603 = vld [vmem:[#allocation5 + $0x1e0] sm:$0xff]
    %v604 = vld [vmem:[#allocation5 + $0x1e8] sm:$0xff]
    %v605 = vld [vmem:[#allocation5 + $0x1f0] sm:$0xff]
    %v606 = vld [vmem:[#allocation5 + $0x1f8] sm:$0xff]
    %v607 = vld [vmem:[%s4] sm:$0x3]
    %v609 = vlaneseq
    %v610 = vshrl.u32 %v609, 7
    %v611 = vsub.s32 0, %v610
    %v612 = vrot.slane %v607, %v611
    %v613 = vlaneseq
    %v614 = vshrl.u32 %v613, 7
    %v615 = vsub.s32 1, %v614
    %v616 = vrot.slane %v607, %v615
    %v683 = vunpack.c.l.b16 %v543
    %v684 = vunpack.c.h.b16 %v543
    %v685 = vunpack.c.l.b16 %v544
    %v686 = vunpack.c.h.b16 %v544
    %v687 = vunpack.c.l.b16 %v545
    %v688 = vunpack.c.h.b16 %v545
    %v689 = vunpack.c.l.b16 %v546
    %v690 = vunpack.c.h.b16 %v546
    %v691 = vunpack.c.l.b16 %v547
    %v692 = vunpack.c.h.b16 %v547
    %v693 = vunpack.c.l.b16 %v548
    %v694 = vunpack.c.h.b16 %v548
    %v695 = vunpack.c.l.b16 %v549
    %v696 = vunpack.c.h.b16 %v549
    %v697 = vunpack.c.l.b16 %v550
    %v698 = vunpack.c.h.b16 %v550
    %v699 = vunpack.c.l.b16 %v551
    %v700 = vunpack.c.h.b16 %v551
    %v701 = vunpack.c.l.b16 %v552
    %v702 = vunpack.c.h.b16 %v552
    %v703 = vunpack.c.l.b16 %v553
    %v704 = vunpack.c.h.b16 %v553
    %v705 = vunpack.c.l.b16 %v554
    %v706 = vunpack.c.h.b16 %v554
    %v707 = vunpack.c.l.b16 %v555
    %v708 = vunpack.c.h.b16 %v555
    %v709 = vunpack.c.l.b16 %v556
    %v710 = vunpack.c.h.b16 %v556
    %v711 = vunpack.c.l.b16 %v557
    %v712 = vunpack.c.h.b16 %v557
    %v713 = vunpack.c.l.b16 %v558
    %v714 = vunpack.c.h.b16 %v558
    %v715 = vunpack.c.l.b16 %v559
    %v716 = vunpack.c.h.b16 %v559
    %v717 = vunpack.c.l.b16 %v560
    %v718 = vunpack.c.h.b16 %v560
    %v719 = vunpack.c.l.b16 %v561
    %v720 = vunpack.c.h.b16 %v561
    %v721 = vunpack.c.l.b16 %v562
    %v722 = vunpack.c.h.b16 %v562
    %v723 = vunpack.c.l.b16 %v563
    %v724 = vunpack.c.h.b16 %v563
    %v725 = vunpack.c.l.b16 %v564
    %v726 = vunpack.c.h.b16 %v564
    %v727 = vunpack.c.l.b16 %v565
    %v728 = vunpack.c.h.b16 %v565
    %v729 = vunpack.c.l.b16 %v566
    %v730 = vunpack.c.h.b16 %v566
    %v731 = vunpack.c.l.b16 %v567
    %v732 = vunpack.c.h.b16 %v567
    %v733 = vunpack.c.l.b16 %v568
    %v734 = vunpack.c.h.b16 %v568
    %v735 = vunpack.c.l.b16 %v569
    %v736 = vunpack.c.h.b16 %v569
    %v737 = vunpack.c.l.b16 %v570
    %v738 = vunpack.c.h.b16 %v570
    %v739 = vunpack.c.l.b16 %v571
    %v740 = vunpack.c.h.b16 %v571
    %v741 = vunpack.c.l.b16 %v572
    %v742 = vunpack.c.h.b16 %v572
    %v743 = vunpack.c.l.b16 %v573
    %v744 = vunpack.c.h.b16 %v573
    %v745 = vunpack.c.l.b16 %v574
    %v746 = vunpack.c.h.b16 %v574
    %v747 = vunpack.c.l.b16 %v575
    %v748 = vunpack.c.h.b16 %v575
    %v749 = vunpack.c.l.b16 %v576
    %v750 = vunpack.c.h.b16 %v576
    %v751 = vunpack.c.l.b16 %v577
    %v752 = vunpack.c.h.b16 %v577
    %v753 = vunpack.c.l.b16 %v578
    %v754 = vunpack.c.h.b16 %v578
    %v755 = vunpack.c.l.b16 %v579
    %v756 = vunpack.c.h.b16 %v579
    %v757 = vunpack.c.l.b16 %v580
    %v758 = vunpack.c.h.b16 %v580
    %v759 = vunpack.c.l.b16 %v581
    %v760 = vunpack.c.h.b16 %v581
    %v761 = vunpack.c.l.b16 %v582
    %v762 = vunpack.c.h.b16 %v582
    %v763 = vunpack.c.l.b16 %v583
    %v764 = vunpack.c.h.b16 %v583
    %v765 = vunpack.c.l.b16 %v584
    %v766 = vunpack.c.h.b16 %v584
    %v767 = vunpack.c.l.b16 %v585
    %v768 = vunpack.c.h.b16 %v585
    %v769 = vunpack.c.l.b16 %v586
    %v770 = vunpack.c.h.b16 %v586
    %v771 = vunpack.c.l.b16 %v587
    %v772 = vunpack.c.h.b16 %v587
    %v773 = vunpack.c.l.b16 %v588
    %v774 = vunpack.c.h.b16 %v588
    %v775 = vunpack.c.l.b16 %v589
    %v776 = vunpack.c.h.b16 %v589
    %v777 = vunpack.c.l.b16 %v590
    %v778 = vunpack.c.h.b16 %v590
    %v779 = vunpack.c.l.b16 %v591
    %v780 = vunpack.c.h.b16 %v591
    %v781 = vunpack.c.l.b16 %v592
    %v782 = vunpack.c.h.b16 %v592
    %v783 = vunpack.c.l.b16 %v593
    %v784 = vunpack.c.h.b16 %v593
    %v785 = vunpack.c.l.b16 %v594
    %v786 = vunpack.c.h.b16 %v594
    %v787 = vunpack.c.l.b16 %v595
    %v788 = vunpack.c.h.b16 %v595
    %v789 = vunpack.c.l.b16 %v596
    %v790 = vunpack.c.h.b16 %v596
    %v791 = vunpack.c.l.b16 %v597
    %v792 = vunpack.c.h.b16 %v597
    %v793 = vunpack.c.l.b16 %v598
    %v794 = vunpack.c.h.b16 %v598
    %v795 = vunpack.c.l.b16 %v599
    %v796 = vunpack.c.h.b16 %v599
    %v797 = vunpack.c.l.b16 %v600
    %v798 = vunpack.c.h.b16 %v600
    %v799 = vunpack.c.l.b16 %v601
    %v800 = vunpack.c.h.b16 %v601
    %v801 = vunpack.c.l.b16 %v602
    %v802 = vunpack.c.h.b16 %v602
    %v803 = vunpack.c.l.b16 %v603
    %v804 = vunpack.c.h.b16 %v603
    %v805 = vunpack.c.l.b16 %v604
    %v806 = vunpack.c.h.b16 %v604
    %v807 = vunpack.c.l.b16 %v605
    %v808 = vunpack.c.h.b16 %v605
    %v809 = vunpack.c.l.b16 %v606
    %v810 = vunpack.c.h.b16 %v606
    %v811 = vpack.c.b16 %v685, %v683
    %v812 = vpack.c.b16 %v686, %v684
    %v813 = vpack.c.b16 %v689, %v687
    %v814 = vpack.c.b16 %v690, %v688
    %v815 = vpack.c.b16 %v693, %v691
    %v816 = vpack.c.b16 %v694, %v692
    %v817 = vpack.c.b16 %v697, %v695
    %v818 = vpack.c.b16 %v698, %v696
    %v819 = vpack.c.b16 %v701, %v699
    %v820 = vpack.c.b16 %v702, %v700
    %v821 = vpack.c.b16 %v705, %v703
    %v822 = vpack.c.b16 %v706, %v704
    %v823 = vpack.c.b16 %v709, %v707
    %v824 = vpack.c.b16 %v710, %v708
    %v825 = vpack.c.b16 %v713, %v711
    %v826 = vpack.c.b16 %v714, %v712
    %v827 = vpack.c.b16 %v717, %v715
    %v828 = vpack.c.b16 %v718, %v716
    %v829 = vpack.c.b16 %v721, %v719
    %v830 = vpack.c.b16 %v722, %v720
    %v831 = vpack.c.b16 %v725, %v723
    %v832 = vpack.c.b16 %v726, %v724
    %v833 = vpack.c.b16 %v729, %v727
    %v834 = vpack.c.b16 %v730, %v728
    %v835 = vpack.c.b16 %v733, %v731
    %v836 = vpack.c.b16 %v734, %v732
    %v837 = vpack.c.b16 %v737, %v735
    %v838 = vpack.c.b16 %v738, %v736
    %v839 = vpack.c.b16 %v741, %v739
    %v840 = vpack.c.b16 %v742, %v740
    %v841 = vpack.c.b16 %v745, %v743
    %v842 = vpack.c.b16 %v746, %v744
    %v843 = vpack.c.b16 %v749, %v747
    %v844 = vpack.c.b16 %v750, %v748
    %v845 = vpack.c.b16 %v753, %v751
    %v846 = vpack.c.b16 %v754, %v752
    %v847 = vpack.c.b16 %v757, %v755
    %v848 = vpack.c.b16 %v758, %v756
    %v849 = vpack.c.b16 %v761, %v759
    %v850 = vpack.c.b16 %v762, %v760
    %v851 = vpack.c.b16 %v765, %v763
    %v852 = vpack.c.b16 %v766, %v764
    %v853 = vpack.c.b16 %v769, %v767
    %v854 = vpack.c.b16 %v770, %v768
    %v855 = vpack.c.b16 %v773, %v771
    %v856 = vpack.c.b16 %v774, %v772
    %v857 = vpack.c.b16 %v777, %v775
    %v858 = vpack.c.b16 %v778, %v776
    %v859 = vpack.c.b16 %v781, %v779
    %v860 = vpack.c.b16 %v782, %v780
    %v861 = vpack.c.b16 %v785, %v783
    %v862 = vpack.c.b16 %v786, %v784
    %v863 = vpack.c.b16 %v789, %v787
    %v864 = vpack.c.b16 %v790, %v788
    %v865 = vpack.c.b16 %v793, %v791
    %v866 = vpack.c.b16 %v794, %v792
    %v867 = vpack.c.b16 %v797, %v795
    %v868 = vpack.c.b16 %v798, %v796
    %v869 = vpack.c.b16 %v801, %v799
    %v870 = vpack.c.b16 %v802, %v800
    %v871 = vpack.c.b16 %v805, %v803
    %v872 = vpack.c.b16 %v806, %v804
    %v873 = vpack.c.b16 %v809, %v807
    %v874 = vpack.c.b16 %v810, %v808
    %939 = vmatprep.subr.bf16.mxu0 %v826
    %940 = vmatpush1.bf16.msra.mxu0 %v825
    %941 = vmatprep.subr.bf16.mxu0 %v824
    %942 = vmatpush1.bf16.msra.mxu0 %v823
    %943 = vmatprep.subr.bf16.mxu0 %v822
    %944 = vmatpush1.bf16.msra.mxu0 %v821
    %945 = vmatprep.subr.bf16.mxu0 %v820
    %946 = vmatpush1.bf16.msra.mxu0 %v819
    %947 = vmatprep.subr.bf16.mxu0 %v818
    %948 = vmatpush1.bf16.msra.mxu0 %v817
    %949 = vmatprep.subr.bf16.mxu0 %v816
    %950 = vmatpush1.bf16.msra.mxu0 %v815
    %951 = vmatprep.subr.bf16.mxu0 %v814
    %952 = vmatpush1.bf16.msra.mxu0 %v813
    %953 = vmatprep.subr.bf16.mxu0 %v812
    %954 = vmatpush1.bf16.msra.mxu0 %v811
    %955 = vmatprep.subr.bf16.mxu0 %v842
    %956 = vmatpush2.bf16.msra.mxu0 %v841
    %957 = vmatprep.subr.bf16.mxu0 %v840
    %958 = vmatpush2.bf16.msra.mxu0 %v839
    %959 = vmatprep.subr.bf16.mxu0 %v838
    %960 = vmatpush2.bf16.msra.mxu0 %v837
    %961 = vmatprep.subr.bf16.mxu0 %v836
    %962 = vmatpush2.bf16.msra.mxu0 %v835
    %963 = vmatprep.subr.bf16.mxu0 %v834
    %964 = vmatpush2.bf16.msra.mxu0 %v833
    %965 = vmatprep.subr.bf16.mxu0 %v832
    %966 = vmatpush2.bf16.msra.mxu0 %v831
    %967 = vmatprep.subr.bf16.mxu0 %v830
    %968 = vmatpush2.bf16.msra.mxu0 %v829
    %969 = vmatprep.subr.bf16.mxu0 %v828
    %970 = vmatpush2.bf16.msra.mxu0 %v827
    %971 = vmatprep.mubr.bf16.mxu0 %v540
    %972 = vmatmul.mubr.bf16.gmra.mxu0 %v539
    %v973 = vpop.f32.mrf.mxu0
    %v974 = vadd.f32 %v612, %v973
    %v975 = vpop.f32.mrf.mxu0
    %v976 = vadd.f32 %v616, %v975
    %v977 = vpop.f32.mrf.mxu0
    %v978 = vpop.f32.mrf.mxu0
    %979 = vdwg.mxu0
    %980 = vmatprep.subr.bf16.mxu0 %v858
    %981 = vmatpush1.bf16.msra.mxu0 %v857
    %982 = vmatprep.subr.bf16.mxu0 %v856
    %983 = vmatpush1.bf16.msra.mxu0 %v855
    %984 = vmatprep.subr.bf16.mxu0 %v854
    %985 = vmatpush1.bf16.msra.mxu0 %v853
    %986 = vmatprep.subr.bf16.mxu0 %v852
    %987 = vmatpush1.bf16.msra.mxu0 %v851
    %988 = vmatprep.subr.bf16.mxu0 %v850
    %989 = vmatpush1.bf16.msra.mxu0 %v849
    %990 = vmatprep.subr.bf16.mxu0 %v848
    %991 = vmatpush1.bf16.msra.mxu0 %v847
    %992 = vmatprep.subr.bf16.mxu0 %v846
    %993 = vmatpush1.bf16.msra.mxu0 %v845
    %994 = vmatprep.subr.bf16.mxu0 %v844
    %995 = vmatpush1.bf16.msra.mxu0 %v843
    %996 = vmatprep.subr.bf16.mxu0 %v874
    %997 = vmatpush2.bf16.msra.mxu0 %v873
    %998 = vmatprep.subr.bf16.mxu0 %v872
    %999 = vmatpush2.bf16.msra.mxu0 %v871
    %1000 = vmatprep.subr.bf16.mxu0 %v870
    %1001 = vmatpush2.bf16.msra.mxu0 %v869
    %1002 = vmatprep.subr.bf16.mxu0 %v868
    %1003 = vmatpush2.bf16.msra.mxu0 %v867
    %1004 = vmatprep.subr.bf16.mxu0 %v866
    %1005 = vmatpush2.bf16.msra.mxu0 %v865
    %1006 = vmatprep.subr.bf16.mxu0 %v864
    %1007 = vmatpush2.bf16.msra.mxu0 %v863
    %1008 = vmatprep.subr.bf16.mxu0 %v862
    %1009 = vmatpush2.bf16.msra.mxu0 %v861
    %1010 = vmatprep.subr.bf16.mxu0 %v860
    %1011 = vmatpush2.bf16.msra.mxu0 %v859
    %1012 = vmatprep.mubr.bf16.mxu0 %v542
    %1013 = vmatmul.mubr.bf16.gmra.mxu0 %v541
    %v1014 = vpop.f32.mrf.mxu0
    %v1015 = vadd.f32 %v974, %v1014
    %v1016 = vpop.f32.mrf.mxu0
    %v1017 = vadd.f32 %v976, %v1016
    %v1018 = vpop.f32.mrf.mxu0
    %v1019 = vpop.f32.mrf.mxu0
    %1020 = vdwg.mxu0
    %vm1021 = vcmask 1041408
    %v1022 = vsel %vm1021, %v1015, 0.0
    %v1023 = vsel %vm1021, %v1017, 0.0
    %v1024 = vadd.f32 %v1022, %v1023
    %1025 = vadd.xlane.f32.xlu0 %v1024
    %v1026 = vpop.xlane.xlu0 %1025
    %v1027 = vrcp.pop 256.0
    %v1028 = vmul.f32 %v1026, %v1027
    %v1029 = vsub.f32 %v1015, %v1028
    %v1030 = vsub.f32 %v1017, %v1028
    %v1031 = vmul.f32 %v1029, %v1029
    %v1032 = vmul.f32 %v1030, %v1030
    %v1033 = vsel %vm1021, %v1031, 0.0
    %v1034 = vsel %vm1021, %v1032, 0.0
    %v1035 = vadd.f32 %v1033, %v1034
    %1036 = vadd.xlane.f32.xlu0 %v1035
    %v1037 = vpop.xlane.xlu0 %1036
    %v1038 = vmul.f32 %v1037, %v1027
    %v1039 = vadd.f32 %v1038, 1e-05
    %v1040 = vrsqrt.pop %v1039
    %v1041 = vmul.f32 %v1029, %v1040
    %v1042 = vmul.f32 %v1030, %v1040
    %v1043 = vld [vmem:[%s5] sm:$0x3]
    %v1045 = vlaneseq
    %v1046 = vshrl.u32 %v1045, 7
    %v1047 = vsub.s32 0, %v1046
    %v1048 = vrot.slane %v1043, %v1047
    %v1049 = vlaneseq
    %v1050 = vshrl.u32 %v1049, 7
    %v1051 = vsub.s32 1, %v1050
    %v1052 = vrot.slane %v1043, %v1051
    %v1055 = vmul.f32 %v1041, %v1048
    %v1056 = vmul.f32 %v1042, %v1052
    %v1057 = vld [vmem:[%s6] sm:$0x3]
    %v1059 = vlaneseq
    %v1060 = vshrl.u32 %v1059, 7
    %v1061 = vsub.s32 0, %v1060
    %v1062 = vrot.slane %v1057, %v1061
    %v1063 = vlaneseq
    %v1064 = vshrl.u32 %v1063, 7
    %v1065 = vsub.s32 1, %v1064
    %v1066 = vrot.slane %v1057, %v1065
    %v1069 = vadd.f32 %v1055, %v1062
    %v1070 = vadd.f32 %v1056, %v1066
    %v1071 = vpack.c.bf16 %v1069, %v1069
    %v1072 = vpack.c.bf16 %v1070, %v1070
    %v1073 = vld [vmem:[#allocation7] sm:$0xf]
    %v1074 = vld [vmem:[#allocation7 + $0x4] sm:$0xf]
    %v1075 = vld [vmem:[#allocation7 + $0x8] sm:$0xf]
    %v1076 = vld [vmem:[#allocation7 + $0xc] sm:$0xf]
    %v1077 = vld [vmem:[#allocation7 + $0x10] sm:$0xf]
    %v1078 = vld [vmem:[#allocation7 + $0x14] sm:$0xf]
    %v1079 = vld [vmem:[#allocation7 + $0x18] sm:$0xf]
    %v1080 = vld [vmem:[#allocation7 + $0x1c] sm:$0xf]
    %v1081 = vld [vmem:[#allocation7 + $0x20] sm:$0xf]
    %v1082 = vld [vmem:[#allocation7 + $0x24] sm:$0xf]
    %v1083 = vld [vmem:[#allocation7 + $0x28] sm:$0xf]
    %v1084 = vld [vmem:[#allocation7 + $0x2c] sm:$0xf]
    %v1085 = vld [vmem:[#allocation7 + $0x30] sm:$0xf]
    %v1086 = vld [vmem:[#allocation7 + $0x34] sm:$0xf]
    %v1087 = vld [vmem:[#allocation7 + $0x38] sm:$0xf]
    %v1088 = vld [vmem:[#allocation7 + $0x3c] sm:$0xf]
    %v1089 = vld [vmem:[#allocation7 + $0x40] sm:$0xf]
    %v1090 = vld [vmem:[#allocation7 + $0x44] sm:$0xf]
    %v1091 = vld [vmem:[#allocation7 + $0x48] sm:$0xf]
    %v1092 = vld [vmem:[#allocation7 + $0x4c] sm:$0xf]
    %v1093 = vld [vmem:[#allocation7 + $0x50] sm:$0xf]
    %v1094 = vld [vmem:[#allocation7 + $0x54] sm:$0xf]
    %v1095 = vld [vmem:[#allocation7 + $0x58] sm:$0xf]
    %v1096 = vld [vmem:[#allocation7 + $0x5c] sm:$0xf]
    %v1097 = vld [vmem:[#allocation7 + $0x60] sm:$0xf]
    %v1098 = vld [vmem:[#allocation7 + $0x64] sm:$0xf]
    %v1099 = vld [vmem:[#allocation7 + $0x68] sm:$0xf]
    %v1100 = vld [vmem:[#allocation7 + $0x6c] sm:$0xf]
    %v1101 = vld [vmem:[#allocation7 + $0x70] sm:$0xf]
    %v1102 = vld [vmem:[#allocation7 + $0x74] sm:$0xf]
    %v1103 = vld [vmem:[#allocation7 + $0x78] sm:$0xf]
    %v1104 = vld [vmem:[#allocation7 + $0x7c] sm:$0xf]
    %v1105 = vld [vmem:[%s8] sm:$0x1]
    %v1107 = vlaneseq
    %v1108 = vshrl.u32 %v1107, 7
    %v1109 = vsub.s32 0, %v1108
    %v1110 = vrot.slane %v1105, %v1109
    %v1144 = vunpack.c.l.b16 %v1073
    %v1145 = vunpack.c.l.b16 %v1074
    %v1146 = vunpack.c.l.b16 %v1075
    %v1147 = vunpack.c.l.b16 %v1076
    %v1148 = vunpack.c.l.b16 %v1077
    %v1149 = vunpack.c.l.b16 %v1078
    %v1150 = vunpack.c.l.b16 %v1079
    %v1151 = vunpack.c.l.b16 %v1080
    %v1152 = vunpack.c.l.b16 %v1081
    %v1153 = vunpack.c.l.b16 %v1082
    %v1154 = vunpack.c.l.b16 %v1083
    %v1155 = vunpack.c.l.b16 %v1084
    %v1156 = vunpack.c.l.b16 %v1085
    %v1157 = vunpack.c.l.b16 %v1086
    %v1158 = vunpack.c.l.b16 %v1087
    %v1159 = vunpack.c.l.b16 %v1088
    %v1160 = vunpack.c.l.b16 %v1089
    %v1161 = vunpack.c.l.b16 %v1090
    %v1162 = vunpack.c.l.b16 %v1091
    %v1163 = vunpack.c.l.b16 %v1092
    %v1164 = vunpack.c.l.b16 %v1093
    %v1165 = vunpack.c.l.b16 %v1094
    %v1166 = vunpack.c.l.b16 %v1095
    %v1167 = vunpack.c.l.b16 %v1096
    %v1168 = vunpack.c.l.b16 %v1097
    %v1169 = vunpack.c.l.b16 %v1098
    %v1170 = vunpack.c.l.b16 %v1099
    %v1171 = vunpack.c.l.b16 %v1100
    %v1172 = vunpack.c.l.b16 %v1101
    %v1173 = vunpack.c.l.b16 %v1102
    %v1174 = vunpack.c.l.b16 %v1103
    %v1175 = vunpack.c.l.b16 %v1104
    %v1176 = vpack.c.b16 %v1145, %v1144
    %v1177 = vpack.c.b16 %v1147, %v1146
    %v1178 = vpack.c.b16 %v1149, %v1148
    %v1179 = vpack.c.b16 %v1151, %v1150
    %v1180 = vpack.c.b16 %v1153, %v1152
    %v1181 = vpack.c.b16 %v1155, %v1154
    %v1182 = vpack.c.b16 %v1157, %v1156
    %v1183 = vpack.c.b16 %v1159, %v1158
    %v1184 = vpack.c.b16 %v1161, %v1160
    %v1185 = vpack.c.b16 %v1163, %v1162
    %v1186 = vpack.c.b16 %v1165, %v1164
    %v1187 = vpack.c.b16 %v1167, %v1166
    %v1188 = vpack.c.b16 %v1169, %v1168
    %v1189 = vpack.c.b16 %v1171, %v1170
    %v1190 = vpack.c.b16 %v1173, %v1172
    %v1191 = vpack.c.b16 %v1175, %v1174
    %1208 = vmatprep.subr.bf16.mxu0 0
    %1209 = vmatpush1.bf16.msra.mxu0 %v1183
    %1210 = vmatprep.subr.bf16.mxu0 0
    %1211 = vmatpush1.bf16.msra.mxu0 %v1182
    %1212 = vmatprep.subr.bf16.mxu0 0
    %1213 = vmatpush1.bf16.msra.mxu0 %v1181
    %1214 = vmatprep.subr.bf16.mxu0 0
    %1215 = vmatpush1.bf16.msra.mxu0 %v1180
    %1216 = vmatprep.subr.bf16.mxu0 0
    %1217 = vmatpush1.bf16.msra.mxu0 %v1179
    %1218 = vmatprep.subr.bf16.mxu0 0
    %1219 = vmatpush1.bf16.msra.mxu0 %v1178
    %1220 = vmatprep.subr.bf16.mxu0 0
    %1221 = vmatpush1.bf16.msra.mxu0 %v1177
    %1222 = vmatprep.subr.bf16.mxu0 0
    %1223 = vmatpush1.bf16.msra.mxu0 %v1176
    %1224 = vmatprep.subr.bf16.mxu0 0
    %1225 = vmatpush2.bf16.msra.mxu0 %v1191
    %1226 = vmatprep.subr.bf16.mxu0 0
    %1227 = vmatpush2.bf16.msra.mxu0 %v1190
    %1228 = vmatprep.subr.bf16.mxu0 0
    %1229 = vmatpush2.bf16.msra.mxu0 %v1189
    %1230 = vmatprep.subr.bf16.mxu0 0
    %1231 = vmatpush2.bf16.msra.mxu0 %v1188
    %1232 = vmatprep.subr.bf16.mxu0 0
    %1233 = vmatpush2.bf16.msra.mxu0 %v1187
    %1234 = vmatprep.subr.bf16.mxu0 0
    %1235 = vmatpush2.bf16.msra.mxu0 %v1186
    %1236 = vmatprep.subr.bf16.mxu0 0
    %1237 = vmatpush2.bf16.msra.mxu0 %v1185
    %1238 = vmatprep.subr.bf16.mxu0 0
    %1239 = vmatpush2.bf16.msra.mxu0 %v1184
    %1240 = vmatprep.mubr.bf16.mxu0 %v1072
    %1241 = vmatmul.mubr.bf16.gmra.mxu0 %v1071
    %v1242 = vpop.f32.mrf.mxu0
    %v1243 = vadd.f32 %v1110, %v1242
    %v1244 = vpop.f32.mrf.mxu0
    %v1245 = vpop.f32.mrf.mxu0
    %v1246 = vpop.f32.mrf.mxu0
    %1247 = vdwg.mxu0
    %v1248 = vmax.f32 %v1243, 0.0
    %v1249 = vpack.c.bf16 %v1248, %v1248
    %v1250 = vld [vmem:[#allocation8] sm:$0xf]
    %v1251 = vld [vmem:[#allocation8 + $0x4] sm:$0xf]
    %v1252 = vld [vmem:[#allocation8 + $0x8] sm:$0xf]
    %v1253 = vld [vmem:[#allocation8 + $0xc] sm:$0xf]
    %v1254 = vld [vmem:[#allocation8 + $0x10] sm:$0xf]
    %v1255 = vld [vmem:[#allocation8 + $0x14] sm:$0xf]
    %v1256 = vld [vmem:[#allocation8 + $0x18] sm:$0xf]
    %v1257 = vld [vmem:[#allocation8 + $0x1c] sm:$0xf]
    %v1258 = vld [vmem:[#allocation8 + $0x20] sm:$0xf]
    %v1259 = vld [vmem:[#allocation8 + $0x24] sm:$0xf]
    %v1260 = vld [vmem:[#allocation8 + $0x28] sm:$0xf]
    %v1261 = vld [vmem:[#allocation8 + $0x2c] sm:$0xf]
    %v1262 = vld [vmem:[#allocation8 + $0x30] sm:$0xf]
    %v1263 = vld [vmem:[#allocation8 + $0x34] sm:$0xf]
    %v1264 = vld [vmem:[#allocation8 + $0x38] sm:$0xf]
    %v1265 = vld [vmem:[#allocation8 + $0x3c] sm:$0xf]
    %v1266 = vld [vmem:[%s10] sm:$0x1]
    %v1268 = vlaneseq
    %v1269 = vshrl.u32 %v1268, 7
    %v1270 = vsub.s32 0, %v1269
    %v1271 = vrot.slane %v1266, %v1270
    %v1289 = vunpack.c.l.b16 %v1250
    %v1290 = vunpack.c.l.b16 %v1251
    %v1291 = vunpack.c.l.b16 %v1252
    %v1292 = vunpack.c.l.b16 %v1253
    %v1293 = vunpack.c.l.b16 %v1254
    %v1294 = vunpack.c.l.b16 %v1255
    %v1295 = vunpack.c.l.b16 %v1256
    %v1296 = vunpack.c.l.b16 %v1257
    %v1297 = vunpack.c.l.b16 %v1258
    %v1298 = vunpack.c.l.b16 %v1259
    %v1299 = vunpack.c.l.b16 %v1260
    %v1300 = vunpack.c.l.b16 %v1261
    %v1301 = vunpack.c.l.b16 %v1262
    %v1302 = vunpack.c.l.b16 %v1263
    %v1303 = vunpack.c.l.b16 %v1264
    %v1304 = vunpack.c.l.b16 %v1265
    %v1305 = vpack.c.b16 %v1290, %v1289
    %v1306 = vpack.c.b16 %v1292, %v1291
    %v1307 = vpack.c.b16 %v1294, %v1293
    %v1308 = vpack.c.b16 %v1296, %v1295
    %v1309 = vpack.c.b16 %v1298, %v1297
    %v1310 = vpack.c.b16 %v1300, %v1299
    %v1311 = vpack.c.b16 %v1302, %v1301
    %v1312 = vpack.c.b16 %v1304, %v1303
    %1321 = vmatprep.subr.bf16.mxu0 0
    %1322 = vmatpush1.bf16.msra.mxu0 %v1312
    %1323 = vmatprep.subr.bf16.mxu0 0
    %1324 = vmatpush1.bf16.msra.mxu0 %v1311
    %1325 = vmatprep.subr.bf16.mxu0 0
    %1326 = vmatpush1.bf16.msra.mxu0 %v1310
    %1327 = vmatprep.subr.bf16.mxu0 0
    %1328 = vmatpush1.bf16.msra.mxu0 %v1309
    %1329 = vmatprep.subr.bf16.mxu0 0
    %1330 = vmatpush1.bf16.msra.mxu0 %v1308
    %1331 = vmatprep.subr.bf16.mxu0 0
    %1332 = vmatpush1.bf16.msra.mxu0 %v1307
    %1333 = vmatprep.subr.bf16.mxu0 0
    %1334 = vmatpush1.bf16.msra.mxu0 %v1306
    %1335 = vmatprep.subr.bf16.mxu0 0
    %1336 = vmatpush1.bf16.msra.mxu0 %v1305
    %1337 = vmatprep.subr.bf16.mxu0 0
    %1338 = vmatpush2.bf16.msra.mxu0 0
    %1339 = vmatprep.subr.bf16.mxu0 0
    %1340 = vmatpush2.bf16.msra.mxu0 0
    %1341 = vmatprep.subr.bf16.mxu0 0
    %1342 = vmatpush2.bf16.msra.mxu0 0
    %1343 = vmatprep.subr.bf16.mxu0 0
    %1344 = vmatpush2.bf16.msra.mxu0 0
    %1345 = vmatprep.subr.bf16.mxu0 0
    %1346 = vmatpush2.bf16.msra.mxu0 0
    %1347 = vmatprep.subr.bf16.mxu0 0
    %1348 = vmatpush2.bf16.msra.mxu0 0
    %1349 = vmatprep.subr.bf16.mxu0 0
    %1350 = vmatpush2.bf16.msra.mxu0 0
    %1351 = vmatprep.subr.bf16.mxu0 0
    %1352 = vmatpush2.bf16.msra.mxu0 0
    %1353 = vmatprep.mubr.bf16.mxu0 0
    %1354 = vmatmul.mubr.bf16.gmra.mxu0 %v1249
    %v1355 = vpop.f32.mrf.mxu0
    %v1356 = vadd.f32 %v1271, %v1355
    %v1357 = vpop.f32.mrf.mxu0
    %v1358 = vpop.f32.mrf.mxu0
    %v1359 = vpop.f32.mrf.mxu0
    %1360 = vdwg.mxu0
    %vm1361 = vcmask 58368
    %1362 = vst.msk [vmem:[#allocation16] sm:$0x3] %vm1361, %v1356
    %v1363 = vld [vmem:[#allocation10] sm:$0xff]
    %v1364 = vld [vmem:[#allocation10 + $0x8] sm:$0xff]
    %v1365 = vld [vmem:[#allocation10 + $0x10] sm:$0xff]
    %v1366 = vld [vmem:[#allocation10 + $0x18] sm:$0xff]
    %v1367 = vld [vmem:[#allocation10 + $0x20] sm:$0xff]
    %v1368 = vld [vmem:[#allocation10 + $0x28] sm:$0xff]
    %v1369 = vld [vmem:[#allocation10 + $0x30] sm:$0xff]
    %v1370 = vld [vmem:[#allocation10 + $0x38] sm:$0xff]
    %v1371 = vld [vmem:[#allocation10 + $0x40] sm:$0xff]
    %v1372 = vld [vmem:[#allocation10 + $0x48] sm:$0xff]
    %v1373 = vld [vmem:[#allocation10 + $0x50] sm:$0xff]
    %v1374 = vld [vmem:[#allocation10 + $0x58] sm:$0xff]
    %v1375 = vld [vmem:[#allocation10 + $0x60] sm:$0xff]
    %v1376 = vld [vmem:[#allocation10 + $0x68] sm:$0xff]
    %v1377 = vld [vmem:[#allocation10 + $0x70] sm:$0xff]
    %v1378 = vld [vmem:[#allocation10 + $0x78] sm:$0xff]
    %v1379 = vld [vmem:[#allocation10 + $0x80] sm:$0xff]
    %v1380 = vld [vmem:[#allocation10 + $0x88] sm:$0xff]
    %v1381 = vld [vmem:[#allocation10 + $0x90] sm:$0xff]
    %v1382 = vld [vmem:[#allocation10 + $0x98] sm:$0xff]
    %v1383 = vld [vmem:[#allocation10 + $0xa0] sm:$0xff]
    %v1384 = vld [vmem:[#allocation10 + $0xa8] sm:$0xff]
    %v1385 = vld [vmem:[#allocation10 + $0xb0] sm:$0xff]
    %v1386 = vld [vmem:[#allocation10 + $0xb8] sm:$0xff]
    %v1387 = vld [vmem:[#allocation10 + $0xc0] sm:$0xff]
    %v1388 = vld [vmem:[#allocation10 + $0xc8] sm:$0xff]
    %v1389 = vld [vmem:[#allocation10 + $0xd0] sm:$0xff]
    %v1390 = vld [vmem:[#allocation10 + $0xd8] sm:$0xff]
    %v1391 = vld [vmem:[#allocation10 + $0xe0] sm:$0xff]
    %v1392 = vld [vmem:[#allocation10 + $0xe8] sm:$0xff]
    %v1393 = vld [vmem:[#allocation10 + $0xf0] sm:$0xff]
    %v1394 = vld [vmem:[#allocation10 + $0xf8] sm:$0xff]
    %v1395 = vld [vmem:[#allocation10 + $0x100] sm:$0xff]
    %v1396 = vld [vmem:[#allocation10 + $0x108] sm:$0xff]
    %v1397 = vld [vmem:[#allocation10 + $0x110] sm:$0xff]
    %v1398 = vld [vmem:[#allocation10 + $0x118] sm:$0xff]
    %v1399 = vld [vmem:[#allocation10 + $0x120] sm:$0xff]
    %v1400 = vld [vmem:[#allocation10 + $0x128] sm:$0xff]
    %v1401 = vld [vmem:[#allocation10 + $0x130] sm:$0xff]
    %v1402 = vld [vmem:[#allocation10 + $0x138] sm:$0xff]
    %v1403 = vld [vmem:[#allocation10 + $0x140] sm:$0xff]
    %v1404 = vld [vmem:[#allocation10 + $0x148] sm:$0xff]
    %v1405 = vld [vmem:[#allocation10 + $0x150] sm:$0xff]
    %v1406 = vld [vmem:[#allocation10 + $0x158] sm:$0xff]
    %v1407 = vld [vmem:[#allocation10 + $0x160] sm:$0xff]
    %v1408 = vld [vmem:[#allocation10 + $0x168] sm:$0xff]
    %v1409 = vld [vmem:[#allocation10 + $0x170] sm:$0xff]
    %v1410 = vld [vmem:[#allocation10 + $0x178] sm:$0xff]
    %v1411 = vld [vmem:[#allocation10 + $0x180] sm:$0xff]
    %v1412 = vld [vmem:[#allocation10 + $0x188] sm:$0xff]
    %v1413 = vld [vmem:[#allocation10 + $0x190] sm:$0xff]
    %v1414 = vld [vmem:[#allocation10 + $0x198] sm:$0xff]
    %v1415 = vld [vmem:[#allocation10 + $0x1a0] sm:$0xff]
    %v1416 = vld [vmem:[#allocation10 + $0x1a8] sm:$0xff]
    %v1417 = vld [vmem:[#allocation10 + $0x1b0] sm:$0xff]
    %v1418 = vld [vmem:[#allocation10 + $0x1b8] sm:$0xff]
    %v1419 = vld [vmem:[#allocation10 + $0x1c0] sm:$0xff]
    %v1420 = vld [vmem:[#allocation10 + $0x1c8] sm:$0xff]
    %v1421 = vld [vmem:[#allocation10 + $0x1d0] sm:$0xff]
    %v1422 = vld [vmem:[#allocation10 + $0x1d8] sm:$0xff]
    %v1423 = vld [vmem:[#allocation10 + $0x1e0] sm:$0xff]
    %v1424 = vld [vmem:[#allocation10 + $0x1e8] sm:$0xff]
    %v1425 = vld [vmem:[#allocation10 + $0x1f0] sm:$0xff]
    %v1426 = vld [vmem:[#allocation10 + $0x1f8] sm:$0xff]
    %v1427 = vpack.c.bf16 %v1356, %v1356
    %v1428 = vld [vmem:[#allocation11] sm:$0xff]
    %v1429 = vld [vmem:[#allocation11 + $0x8] sm:$0xff]
    %v1430 = vld [vmem:[#allocation11 + $0x10] sm:$0xff]
    %v1431 = vld [vmem:[#allocation11 + $0x18] sm:$0xff]
    %v1432 = vld [vmem:[#allocation11 + $0x20] sm:$0xff]
    %v1433 = vld [vmem:[#allocation11 + $0x28] sm:$0xff]
    %v1434 = vld [vmem:[#allocation11 + $0x30] sm:$0xff]
    %v1435 = vld [vmem:[#allocation11 + $0x38] sm:$0xff]
    %v1436 = vld [vmem:[#allocation11 + $0x40] sm:$0xff]
    %v1437 = vld [vmem:[#allocation11 + $0x48] sm:$0xff]
    %v1438 = vld [vmem:[#allocation11 + $0x50] sm:$0xff]
    %v1439 = vld [vmem:[#allocation11 + $0x58] sm:$0xff]
    %v1440 = vld [vmem:[#allocation11 + $0x60] sm:$0xff]
    %v1441 = vld [vmem:[#allocation11 + $0x68] sm:$0xff]
    %v1442 = vld [vmem:[#allocation11 + $0x70] sm:$0xff]
    %v1443 = vld [vmem:[#allocation11 + $0x78] sm:$0xff]
    %v1444 = vld [vmem:[#allocation11 + $0x80] sm:$0xff]
    %v1445 = vld [vmem:[#allocation11 + $0x88] sm:$0xff]
    %v1446 = vld [vmem:[#allocation11 + $0x90] sm:$0xff]
    %v1447 = vld [vmem:[#allocation11 + $0x98] sm:$0xff]
    %v1448 = vld [vmem:[#allocation11 + $0xa0] sm:$0xff]
    %v1449 = vld [vmem:[#allocation11 + $0xa8] sm:$0xff]
    %v1450 = vld [vmem:[#allocation11 + $0xb0] sm:$0xff]
    %v1451 = vld [vmem:[#allocation11 + $0xb8] sm:$0xff]
    %v1452 = vld [vmem:[#allocation11 + $0xc0] sm:$0xff]
    %v1453 = vld [vmem:[#allocation11 + $0xc8] sm:$0xff]
    %v1454 = vld [vmem:[#allocation11 + $0xd0] sm:$0xff]
    %v1455 = vld [vmem:[#allocation11 + $0xd8] sm:$0xff]
    %v1456 = vld [vmem:[#allocation11 + $0xe0] sm:$0xff]
    %v1457 = vld [vmem:[#allocation11 + $0xe8] sm:$0xff]
    %v1458 = vld [vmem:[#allocation11 + $0xf0] sm:$0xff]
    %v1459 = vld [vmem:[#allocation11 + $0xf8] sm:$0xff]
    %v1492 = vunpack.c.l.b16 %v1428
    %v1493 = vunpack.c.h.b16 %v1428
    %v1494 = vunpack.c.l.b16 %v1429
    %v1495 = vunpack.c.h.b16 %v1429
    %v1496 = vunpack.c.l.b16 %v1430
    %v1497 = vunpack.c.h.b16 %v1430
    %v1498 = vunpack.c.l.b16 %v1431
    %v1499 = vunpack.c.h.b16 %v1431
    %v1500 = vunpack.c.l.b16 %v1432
    %v1501 = vunpack.c.h.b16 %v1432
    %v1502 = vunpack.c.l.b16 %v1433
    %v1503 = vunpack.c.h.b16 %v1433
    %v1504 = vunpack.c.l.b16 %v1434
    %v1505 = vunpack.c.h.b16 %v1434
    %v1506 = vunpack.c.l.b16 %v1435
    %v1507 = vunpack.c.h.b16 %v1435
    %v1508 = vunpack.c.l.b16 %v1436
    %v1509 = vunpack.c.h.b16 %v1436
    %v1510 = vunpack.c.l.b16 %v1437
    %v1511 = vunpack.c.h.b16 %v1437
    %v1512 = vunpack.c.l.b16 %v1438
    %v1513 = vunpack.c.h.b16 %v1438
    %v1514 = vunpack.c.l.b16 %v1439
    %v1515 = vunpack.c.h.b16 %v1439
    %v1516 = vunpack.c.l.b16 %v1440
    %v1517 = vunpack.c.h.b16 %v1440
    %v1518 = vunpack.c.l.b16 %v1441
    %v1519 = vunpack.c.h.b16 %v1441
    %v1520 = vunpack.c.l.b16 %v1442
    %v1521 = vunpack.c.h.b16 %v1442
    %v1522 = vunpack.c.l.b16 %v1443
    %v1523 = vunpack.c.h.b16 %v1443
    %v1524 = vunpack.c.l.b16 %v1444
    %v1525 = vunpack.c.h.b16 %v1444
    %v1526 = vunpack.c.l.b16 %v1445
    %v1527 = vunpack.c.h.b16 %v1445
    %v1528 = vunpack.c.l.b16 %v1446
    %v1529 = vunpack.c.h.b16 %v1446
    %v1530 = vunpack.c.l.b16 %v1447
    %v1531 = vunpack.c.h.b16 %v1447
    %v1532 = vunpack.c.l.b16 %v1448
    %v1533 = vunpack.c.h.b16 %v1448
    %v1534 = vunpack.c.l.b16 %v1449
    %v1535 = vunpack.c.h.b16 %v1449
    %v1536 = vunpack.c.l.b16 %v1450
    %v1537 = vunpack.c.h.b16 %v1450
    %v1538 = vunpack.c.l.b16 %v1451
    %v1539 = vunpack.c.h.b16 %v1451
    %v1540 = vunpack.c.l.b16 %v1452
    %v1541 = vunpack.c.h.b16 %v1452
    %v1542 = vunpack.c.l.b16 %v1453
    %v1543 = vunpack.c.h.b16 %v1453
    %v1544 = vunpack.c.l.b16 %v1454
    %v1545 = vunpack.c.h.b16 %v1454
    %v1546 = vunpack.c.l.b16 %v1455
    %v1547 = vunpack.c.h.b16 %v1455
    %v1548 = vunpack.c.l.b16 %v1456
    %v1549 = vunpack.c.h.b16 %v1456
    %v1550 = vunpack.c.l.b16 %v1457
    %v1551 = vunpack.c.h.b16 %v1457
    %v1552 = vunpack.c.l.b16 %v1458
    %v1553 = vunpack.c.h.b16 %v1458
    %v1554 = vunpack.c.l.b16 %v1459
    %v1555 = vunpack.c.h.b16 %v1459
    %v1556 = vpack.c.b16 %v1496, %v1492
    %v1557 = vpack.c.b16 %v1497, %v1493
    %v1558 = vpack.c.b16 %v1498, %v1494
    %v1559 = vpack.c.b16 %v1499, %v1495
    %v1560 = vpack.c.b16 %v1504, %v1500
    %v1561 = vpack.c.b16 %v1505, %v1501
    %v1562 = vpack.c.b16 %v1506, %v1502
    %v1563 = vpack.c.b16 %v1507, %v1503
    %v1564 = vpack.c.b16 %v1512, %v1508
    %v1565 = vpack.c.b16 %v1513, %v1509
    %v1566 = vpack.c.b16 %v1514, %v1510
    %v1567 = vpack.c.b16 %v1515, %v1511
    %v1568 = vpack.c.b16 %v1520, %v1516
    %v1569 = vpack.c.b16 %v1521, %v1517
    %v1570 = vpack.c.b16 %v1522, %v1518
    %v1571 = vpack.c.b16 %v1523, %v1519
    %v1572 = vpack.c.b16 %v1528, %v1524
    %v1573 = vpack.c.b16 %v1529, %v1525
    %v1574 = vpack.c.b16 %v1530, %v1526
    %v1575 = vpack.c.b16 %v1531, %v1527
    %v1576 = vpack.c.b16 %v1536, %v1532
    %v1577 = vpack.c.b16 %v1537, %v1533
    %v1578 = vpack.c.b16 %v1538, %v1534
    %v1579 = vpack.c.b16 %v1539, %v1535
    %v1580 = vpack.c.b16 %v1544, %v1540
    %v1581 = vpack.c.b16 %v1545, %v1541
    %v1582 = vpack.c.b16 %v1546, %v1542
    %v1583 = vpack.c.b16 %v1547, %v1543
    %v1584 = vpack.c.b16 %v1552, %v1548
    %v1585 = vpack.c.b16 %v1553, %v1549
    %v1586 = vpack.c.b16 %v1554, %v1550
    %v1587 = vpack.c.b16 %v1555, %v1551
    %1620 = vmatprep.subr.bf16.mxu0 %v1585
    %1621 = vmatpush1.bf16.msra.mxu0 %v1584
    %1622 = vmatprep.subr.bf16.mxu0 %v1581
    %1623 = vmatpush1.bf16.msra.mxu0 %v1580
    %1624 = vmatprep.subr.bf16.mxu0 %v1577
    %1625 = vmatpush1.bf16.msra.mxu0 %v1576
    %1626 = vmatprep.subr.bf16.mxu0 %v1573
    %1627 = vmatpush1.bf16.msra.mxu0 %v1572
    %1628 = vmatprep.subr.bf16.mxu0 %v1569
    %1629 = vmatpush1.bf16.msra.mxu0 %v1568
    %1630 = vmatprep.subr.bf16.mxu0 %v1565
    %1631 = vmatpush1.bf16.msra.mxu0 %v1564
    %1632 = vmatprep.subr.bf16.mxu0 %v1561
    %1633 = vmatpush1.bf16.msra.mxu0 %v1560
    %1634 = vmatprep.subr.bf16.mxu0 %v1557
    %1635 = vmatpush1.bf16.msra.mxu0 %v1556
    %1636 = vmatprep.subr.bf16.mxu0 0
    %1637 = vmatpush2.bf16.msra.mxu0 0
    %1638 = vmatprep.subr.bf16.mxu0 0
    %1639 = vmatpush2.bf16.msra.mxu0 0
    %1640 = vmatprep.subr.bf16.mxu0 0
    %1641 = vmatpush2.bf16.msra.mxu0 0
    %1642 = vmatprep.subr.bf16.mxu0 0
    %1643 = vmatpush2.bf16.msra.mxu0 0
    %1644 = vmatprep.subr.bf16.mxu0 0
    %1645 = vmatpush2.bf16.msra.mxu0 0
    %1646 = vmatprep.subr.bf16.mxu0 0
    %1647 = vmatpush2.bf16.msra.mxu0 0
    %1648 = vmatprep.subr.bf16.mxu0 0
    %1649 = vmatpush2.bf16.msra.mxu0 0
    %1650 = vmatprep.subr.bf16.mxu0 0
    %1651 = vmatpush2.bf16.msra.mxu0 0
    %1652 = vmatprep.mubr.bf16.mxu0 0
    %1653 = vmatmul.mubr.bf16.gmra.mxu0 %v1427
    %v1654 = vpop.f32.mrf.mxu0
    %v1655 = vadd.f32 0.0, %v1654
    %v1656 = vpop.f32.mrf.mxu0
    %v1657 = vadd.f32 0.0, %v1656
    %v1658 = vpop.f32.mrf.mxu0
    %v1659 = vpop.f32.mrf.mxu0
    %1660 = vdwg.mxu0
    %1661 = vmatprep.subr.bf16.mxu0 %v1587
    %1662 = vmatpush1.bf16.msra.mxu0 %v1586
    %1663 = vmatprep.subr.bf16.mxu0 %v1583
    %1664 = vmatpush1.bf16.msra.mxu0 %v1582
    %1665 = vmatprep.subr.bf16.mxu0 %v1579
    %1666 = vmatpush1.bf16.msra.mxu0 %v1578
    %1667 = vmatprep.subr.bf16.mxu0 %v1575
    %1668 = vmatpush1.bf16.msra.mxu0 %v1574
    %1669 = vmatprep.subr.bf16.mxu0 %v1571
    %1670 = vmatpush1.bf16.msra.mxu0 %v1570
    %1671 = vmatprep.subr.bf16.mxu0 %v1567
    %1672 = vmatpush1.bf16.msra.mxu0 %v1566
    %1673 = vmatprep.subr.bf16.mxu0 %v1563
    %1674 = vmatpush1.bf16.msra.mxu0 %v1562
    %1675 = vmatprep.subr.bf16.mxu0 %v1559
    %1676 = vmatpush1.bf16.msra.mxu0 %v1558
    %1677 = vmatprep.subr.bf16.mxu0 0
    %1678 = vmatpush2.bf16.msra.mxu0 0
    %1679 = vmatprep.subr.bf16.mxu0 0
    %1680 = vmatpush2.bf16.msra.mxu0 0
    %1681 = vmatprep.subr.bf16.mxu0 0
    %1682 = vmatpush2.bf16.msra.mxu0 0
    %1683 = vmatprep.subr.bf16.mxu0 0
    %1684 = vmatpush2.bf16.msra.mxu0 0
    %1685 = vmatprep.subr.bf16.mxu0 0
    %1686 = vmatpush2.bf16.msra.mxu0 0
    %1687 = vmatprep.subr.bf16.mxu0 0
    %1688 = vmatpush2.bf16.msra.mxu0 0
    %1689 = vmatprep.subr.bf16.mxu0 0
    %1690 = vmatpush2.bf16.msra.mxu0 0
    %1691 = vmatprep.subr.bf16.mxu0 0
    %1692 = vmatpush2.bf16.msra.mxu0 0
    %1693 = vmatprep.mubr.bf16.mxu0 0
    %1694 = vmatmul.mubr.bf16.gmra.mxu0 %v1427
    %v1695 = vpop.f32.mrf.mxu0
    %v1696 = vadd.f32 0.0, %v1695
    %v1697 = vpop.f32.mrf.mxu0
    %v1698 = vadd.f32 0.0, %v1697
    %v1699 = vpop.f32.mrf.mxu0
    %v1700 = vpop.f32.mrf.mxu0
    %1701 = vdwg.mxu0
    %v1766 = vunpack.c.l.b16 %v1363
    %v1767 = vunpack.c.h.b16 %v1363
    %v1768 = vunpack.c.l.b16 %v1364
    %v1769 = vunpack.c.h.b16 %v1364
    %v1770 = vunpack.c.l.b16 %v1365
    %v1771 = vunpack.c.h.b16 %v1365
    %v1772 = vunpack.c.l.b16 %v1366
    %v1773 = vunpack.c.h.b16 %v1366
    %v1774 = vunpack.c.l.b16 %v1367
    %v1775 = vunpack.c.h.b16 %v1367
    %v1776 = vunpack.c.l.b16 %v1368
    %v1777 = vunpack.c.h.b16 %v1368
    %v1778 = vunpack.c.l.b16 %v1369
    %v1779 = vunpack.c.h.b16 %v1369
    %v1780 = vunpack.c.l.b16 %v1370
    %v1781 = vunpack.c.h.b16 %v1370
    %v1782 = vunpack.c.l.b16 %v1371
    %v1783 = vunpack.c.h.b16 %v1371
    %v1784 = vunpack.c.l.b16 %v1372
    %v1785 = vunpack.c.h.b16 %v1372
    %v1786 = vunpack.c.l.b16 %v1373
    %v1787 = vunpack.c.h.b16 %v1373
    %v1788 = vunpack.c.l.b16 %v1374
    %v1789 = vunpack.c.h.b16 %v1374
    %v1790 = vunpack.c.l.b16 %v1375
    %v1791 = vunpack.c.h.b16 %v1375
    %v1792 = vunpack.c.l.b16 %v1376
    %v1793 = vunpack.c.h.b16 %v1376
    %v1794 = vunpack.c.l.b16 %v1377
    %v1795 = vunpack.c.h.b16 %v1377
    %v1796 = vunpack.c.l.b16 %v1378
    %v1797 = vunpack.c.h.b16 %v1378
    %v1798 = vunpack.c.l.b16 %v1379
    %v1799 = vunpack.c.h.b16 %v1379
    %v1800 = vunpack.c.l.b16 %v1380
    %v1801 = vunpack.c.h.b16 %v1380
    %v1802 = vunpack.c.l.b16 %v1381
    %v1803 = vunpack.c.h.b16 %v1381
    %v1804 = vunpack.c.l.b16 %v1382
    %v1805 = vunpack.c.h.b16 %v1382
    %v1806 = vunpack.c.l.b16 %v1383
    %v1807 = vunpack.c.h.b16 %v1383
    %v1808 = vunpack.c.l.b16 %v1384
    %v1809 = vunpack.c.h.b16 %v1384
    %v1810 = vunpack.c.l.b16 %v1385
    %v1811 = vunpack.c.h.b16 %v1385
    %v1812 = vunpack.c.l.b16 %v1386
    %v1813 = vunpack.c.h.b16 %v1386
    %v1814 = vunpack.c.l.b16 %v1387
    %v1815 = vunpack.c.h.b16 %v1387
    %v1816 = vunpack.c.l.b16 %v1388
    %v1817 = vunpack.c.h.b16 %v1388
    %v1818 = vunpack.c.l.b16 %v1389
    %v1819 = vunpack.c.h.b16 %v1389
    %v1820 = vunpack.c.l.b16 %v1390
    %v1821 = vunpack.c.h.b16 %v1390
    %v1822 = vunpack.c.l.b16 %v1391
    %v1823 = vunpack.c.h.b16 %v1391
    %v1824 = vunpack.c.l.b16 %v1392
    %v1825 = vunpack.c.h.b16 %v1392
    %v1826 = vunpack.c.l.b16 %v1393
    %v1827 = vunpack.c.h.b16 %v1393
    %v1828 = vunpack.c.l.b16 %v1394
    %v1829 = vunpack.c.h.b16 %v1394
    %v1830 = vunpack.c.l.b16 %v1395
    %v1831 = vunpack.c.h.b16 %v1395
    %v1832 = vunpack.c.l.b16 %v1396
    %v1833 = vunpack.c.h.b16 %v1396
    %v1834 = vunpack.c.l.b16 %v1397
    %v1835 = vunpack.c.h.b16 %v1397
    %v1836 = vunpack.c.l.b16 %v1398
    %v1837 = vunpack.c.h.b16 %v1398
    %v1838 = vunpack.c.l.b16 %v1399
    %v1839 = vunpack.c.h.b16 %v1399
    %v1840 = vunpack.c.l.b16 %v1400
    %v1841 = vunpack.c.h.b16 %v1400
    %v1842 = vunpack.c.l.b16 %v1401
    %v1843 = vunpack.c.h.b16 %v1401
    %v1844 = vunpack.c.l.b16 %v1402
    %v1845 = vunpack.c.h.b16 %v1402
    %v1846 = vunpack.c.l.b16 %v1403
    %v1847 = vunpack.c.h.b16 %v1403
    %v1848 = vunpack.c.l.b16 %v1404
    %v1849 = vunpack.c.h.b16 %v1404
    %v1850 = vunpack.c.l.b16 %v1405
    %v1851 = vunpack.c.h.b16 %v1405
    %v1852 = vunpack.c.l.b16 %v1406
    %v1853 = vunpack.c.h.b16 %v1406
    %v1854 = vunpack.c.l.b16 %v1407
    %v1855 = vunpack.c.h.b16 %v1407
    %v1856 = vunpack.c.l.b16 %v1408
    %v1857 = vunpack.c.h.b16 %v1408
    %v1858 = vunpack.c.l.b16 %v1409
    %v1859 = vunpack.c.h.b16 %v1409
    %v1860 = vunpack.c.l.b16 %v1410
    %v1861 = vunpack.c.h.b16 %v1410
    %v1862 = vunpack.c.l.b16 %v1411
    %v1863 = vunpack.c.h.b16 %v1411
    %v1864 = vunpack.c.l.b16 %v1412
    %v1865 = vunpack.c.h.b16 %v1412
    %v1866 = vunpack.c.l.b16 %v1413
    %v1867 = vunpack.c.h.b16 %v1413
    %v1868 = vunpack.c.l.b16 %v1414
    %v1869 = vunpack.c.h.b16 %v1414
    %v1870 = vunpack.c.l.b16 %v1415
    %v1871 = vunpack.c.h.b16 %v1415
    %v1872 = vunpack.c.l.b16 %v1416
    %v1873 = vunpack.c.h.b16 %v1416
    %v1874 = vunpack.c.l.b16 %v1417
    %v1875 = vunpack.c.h.b16 %v1417
    %v1876 = vunpack.c.l.b16 %v1418
    %v1877 = vunpack.c.h.b16 %v1418
    %v1878 = vunpack.c.l.b16 %v1419
    %v1879 = vunpack.c.h.b16 %v1419
    %v1880 = vunpack.c.l.b16 %v1420
    %v1881 = vunpack.c.h.b16 %v1420
    %v1882 = vunpack.c.l.b16 %v1421
    %v1883 = vunpack.c.h.b16 %v1421
    %v1884 = vunpack.c.l.b16 %v1422
    %v1885 = vunpack.c.h.b16 %v1422
    %v1886 = vunpack.c.l.b16 %v1423
    %v1887 = vunpack.c.h.b16 %v1423
    %v1888 = vunpack.c.l.b16 %v1424
    %v1889 = vunpack.c.h.b16 %v1424
    %v1890 = vunpack.c.l.b16 %v1425
    %v1891 = vunpack.c.h.b16 %v1425
    %v1892 = vunpack.c.l.b16 %v1426
    %v1893 = vunpack.c.h.b16 %v1426
    %v1894 = vpack.c.b16 %v1770, %v1766
    %v1895 = vpack.c.b16 %v1771, %v1767
    %v1896 = vpack.c.b16 %v1772, %v1768
    %v1897 = vpack.c.b16 %v1773, %v1769
    %v1898 = vpack.c.b16 %v1778, %v1774
    %v1899 = vpack.c.b16 %v1779, %v1775
    %v1900 = vpack.c.b16 %v1780, %v1776
    %v1901 = vpack.c.b16 %v1781, %v1777
    %v1902 = vpack.c.b16 %v1786, %v1782
    %v1903 = vpack.c.b16 %v1787, %v1783
    %v1904 = vpack.c.b16 %v1788, %v1784
    %v1905 = vpack.c.b16 %v1789, %v1785
    %v1906 = vpack.c.b16 %v1794, %v1790
    %v1907 = vpack.c.b16 %v1795, %v1791
    %v1908 = vpack.c.b16 %v1796, %v1792
    %v1909 = vpack.c.b16 %v1797, %v1793
    %v1910 = vpack.c.b16 %v1802, %v1798
    %v1911 = vpack.c.b16 %v1803, %v1799
    %v1912 = vpack.c.b16 %v1804, %v1800
    %v1913 = vpack.c.b16 %v1805, %v1801
    %v1914 = vpack.c.b16 %v1810, %v1806
    %v1915 = vpack.c.b16 %v1811, %v1807
    %v1916 = vpack.c.b16 %v1812, %v1808
    %v1917 = vpack.c.b16 %v1813, %v1809
    %v1918 = vpack.c.b16 %v1818, %v1814
    %v1919 = vpack.c.b16 %v1819, %v1815
    %v1920 = vpack.c.b16 %v1820, %v1816
    %v1921 = vpack.c.b16 %v1821, %v1817
    %v1922 = vpack.c.b16 %v1826, %v1822
    %v1923 = vpack.c.b16 %v1827, %v1823
    %v1924 = vpack.c.b16 %v1828, %v1824
    %v1925 = vpack.c.b16 %v1829, %v1825
    %v1926 = vpack.c.b16 %v1834, %v1830
    %v1927 = vpack.c.b16 %v1835, %v1831
    %v1928 = vpack.c.b16 %v1836, %v1832
    %v1929 = vpack.c.b16 %v1837, %v1833
    %v1930 = vpack.c.b16 %v1842, %v1838
    %v1931 = vpack.c.b16 %v1843, %v1839
    %v1932 = vpack.c.b16 %v1844, %v1840
    %v1933 = vpack.c.b16 %v1845, %v1841
    %v1934 = vpack.c.b16 %v1850, %v1846
    %v1935 = vpack.c.b16 %v1851, %v1847
    %v1936 = vpack.c.b16 %v1852, %v1848
    %v1937 = vpack.c.b16 %v1853, %v1849
    %v1938 = vpack.c.b16 %v1858, %v1854
    %v1939 = vpack.c.b16 %v1859, %v1855
    %v1940 = vpack.c.b16 %v1860, %v1856
    %v1941 = vpack.c.b16 %v1861, %v1857
    %v1942 = vpack.c.b16 %v1866, %v1862
    %v1943 = vpack.c.b16 %v1867, %v1863
    %v1944 = vpack.c.b16 %v1868, %v1864
    %v1945 = vpack.c.b16 %v1869, %v1865
    %v1946 = vpack.c.b16 %v1874, %v1870
    %v1947 = vpack.c.b16 %v1875, %v1871
    %v1948 = vpack.c.b16 %v1876, %v1872
    %v1949 = vpack.c.b16 %v1877, %v1873
    %v1950 = vpack.c.b16 %v1882, %v1878
    %v1951 = vpack.c.b16 %v1883, %v1879
    %v1952 = vpack.c.b16 %v1884, %v1880
    %v1953 = vpack.c.b16 %v1885, %v1881
    %v1954 = vpack.c.b16 %v1890, %v1886
    %v1955 = vpack.c.b16 %v1891, %v1887
    %v1956 = vpack.c.b16 %v1892, %v1888
    %v1957 = vpack.c.b16 %v1893, %v1889
    %2022 = vmatprep.subr.bf16.mxu0 %v1923
    %2023 = vmatpush1.bf16.msra.mxu0 %v1922
    %2024 = vmatprep.subr.bf16.mxu0 %v1919
    %2025 = vmatpush1.bf16.msra.mxu0 %v1918
    %2026 = vmatprep.subr.bf16.mxu0 %v1915
    %2027 = vmatpush1.bf16.msra.mxu0 %v1914
    %2028 = vmatprep.subr.bf16.mxu0 %v1911
    %2029 = vmatpush1.bf16.msra.mxu0 %v1910
    %2030 = vmatprep.subr.bf16.mxu0 %v1907
    %2031 = vmatpush1.bf16.msra.mxu0 %v1906
    %2032 = vmatprep.subr.bf16.mxu0 %v1903
    %2033 = vmatpush1.bf16.msra.mxu0 %v1902
    %2034 = vmatprep.subr.bf16.mxu0 %v1899
    %2035 = vmatpush1.bf16.msra.mxu0 %v1898
    %2036 = vmatprep.subr.bf16.mxu0 %v1895
    %2037 = vmatpush1.bf16.msra.mxu0 %v1894
    %2038 = vmatprep.subr.bf16.mxu0 %v1955
    %2039 = vmatpush2.bf16.msra.mxu0 %v1954
    %2040 = vmatprep.subr.bf16.mxu0 %v1951
    %2041 = vmatpush2.bf16.msra.mxu0 %v1950
    %2042 = vmatprep.subr.bf16.mxu0 %v1947
    %2043 = vmatpush2.bf16.msra.mxu0 %v1946
    %2044 = vmatprep.subr.bf16.mxu0 %v1943
    %2045 = vmatpush2.bf16.msra.mxu0 %v1942
    %2046 = vmatprep.subr.bf16.mxu0 %v1939
    %2047 = vmatpush2.bf16.msra.mxu0 %v1938
    %2048 = vmatprep.subr.bf16.mxu0 %v1935
    %2049 = vmatpush2.bf16.msra.mxu0 %v1934
    %2050 = vmatprep.subr.bf16.mxu0 %v1931
    %2051 = vmatpush2.bf16.msra.mxu0 %v1930
    %2052 = vmatprep.subr.bf16.mxu0 %v1927
    %2053 = vmatpush2.bf16.msra.mxu0 %v1926
    %2054 = vmatprep.mubr.bf16.mxu0 %v1072
    %2055 = vmatmul.mubr.bf16.gmra.mxu0 %v1071
    %v2056 = vpop.f32.mrf.mxu0
    %v2057 = vadd.f32 %v1655, %v2056
    %v2058 = vpop.f32.mrf.mxu0
    %v2059 = vadd.f32 %v1657, %v2058
    %v2060 = vpop.f32.mrf.mxu0
    %v2061 = vpop.f32.mrf.mxu0
    %2062 = vdwg.mxu0
    %2063 = vmatprep.subr.bf16.mxu0 %v1925
    %2064 = vmatpush1.bf16.msra.mxu0 %v1924
    %2065 = vmatprep.subr.bf16.mxu0 %v1921
    %2066 = vmatpush1.bf16.msra.mxu0 %v1920
    %2067 = vmatprep.subr.bf16.mxu0 %v1917
    %2068 = vmatpush1.bf16.msra.mxu0 %v1916
    %2069 = vmatprep.subr.bf16.mxu0 %v1913
    %2070 = vmatpush1.bf16.msra.mxu0 %v1912
    %2071 = vmatprep.subr.bf16.mxu0 %v1909
    %2072 = vmatpush1.bf16.msra.mxu0 %v1908
    %2073 = vmatprep.subr.bf16.mxu0 %v1905
    %2074 = vmatpush1.bf16.msra.mxu0 %v1904
    %2075 = vmatprep.subr.bf16.mxu0 %v1901
    %2076 = vmatpush1.bf16.msra.mxu0 %v1900
    %2077 = vmatprep.subr.bf16.mxu0 %v1897
    %2078 = vmatpush1.bf16.msra.mxu0 %v1896
    %2079 = vmatprep.subr.bf16.mxu0 %v1957
    %2080 = vmatpush2.bf16.msra.mxu0 %v1956
    %2081 = vmatprep.subr.bf16.mxu0 %v1953
    %2082 = vmatpush2.bf16.msra.mxu0 %v1952
    %2083 = vmatprep.subr.bf16.mxu0 %v1949
    %2084 = vmatpush2.bf16.msra.mxu0 %v1948
    %2085 = vmatprep.subr.bf16.mxu0 %v1945
    %2086 = vmatpush2.bf16.msra.mxu0 %v1944
    %2087 = vmatprep.subr.bf16.mxu0 %v1941
    %2088 = vmatpush2.bf16.msra.mxu0 %v1940
    %2089 = vmatprep.subr.bf16.mxu0 %v1937
    %2090 = vmatpush2.bf16.msra.mxu0 %v1936
    %2091 = vmatprep.subr.bf16.mxu0 %v1933
    %2092 = vmatpush2.bf16.msra.mxu0 %v1932
    %2093 = vmatprep.subr.bf16.mxu0 %v1929
    %2094 = vmatpush2.bf16.msra.mxu0 %v1928
    %2095 = vmatprep.mubr.bf16.mxu0 %v1072
    %2096 = vmatmul.mubr.bf16.gmra.mxu0 %v1071
    %v2097 = vpop.f32.mrf.mxu0
    %v2098 = vadd.f32 %v1696, %v2097
    %v2099 = vpop.f32.mrf.mxu0
    %v2100 = vadd.f32 %v1698, %v2099
    %v2101 = vpop.f32.mrf.mxu0
    %v2102 = vpop.f32.mrf.mxu0
    %2103 = vdwg.mxu0
    %v2104 = vld [vmem:[%s13] sm:$0xf]
    %v2106 = vlaneseq
    %v2107 = vshrl.u32 %v2106, 7
    %v2108 = vsub.s32 0, %v2107
    %v2109 = vrot.slane %v2104, %v2108
    %v2110 = vlaneseq
    %v2111 = vshrl.u32 %v2110, 7
    %v2112 = vsub.s32 1, %v2111
    %v2113 = vrot.slane %v2104, %v2112
    %v2114 = vlaneseq
    %v2115 = vshrl.u32 %v2114, 7
    %v2116 = vsub.s32 2, %v2115
    %v2117 = vrot.slane %v2104, %v2116
    %v2118 = vlaneseq
    %v2119 = vshrl.u32 %v2118, 7
    %v2120 = vsub.s32 3, %v2119
    %v2121 = vrot.slane %v2104, %v2120
    %v2126 = vadd.f32 %v2057, %v2109
    %v2127 = vadd.f32 %v2059, %v2113
    %v2128 = vadd.f32 %v2098, %v2117
    %v2129 = vadd.f32 %v2100, %v2121
    %v2130 = vmax.f32 %v2126, 0.0
    %v2131 = vmax.f32 %v2127, 0.0
    %v2132 = vmax.f32 %v2128, 0.0
    %v2133 = vmax.f32 %v2129, 0.0
    %v2134 = vpack.c.bf16 %v2130, %v2130
    %v2135 = vpack.c.bf16 %v2131, %v2131
    %v2136 = vpack.c.bf16 %v2132, %v2132
    %v2137 = vpack.c.bf16 %v2133, %v2133
    %v2138 = vld [vmem:[#allocation13] sm:$0xff]
    %v2139 = vld [vmem:[#allocation13 + $0x8] sm:$0xff]
    %v2140 = vld [vmem:[#allocation13 + $0x10] sm:$0xff]
    %v2141 = vld [vmem:[#allocation13 + $0x18] sm:$0xff]
    %v2142 = vld [vmem:[#allocation13 + $0x20] sm:$0xff]
    %v2143 = vld [vmem:[#allocation13 + $0x28] sm:$0xff]
    %v2144 = vld [vmem:[#allocation13 + $0x30] sm:$0xff]
    %v2145 = vld [vmem:[#allocation13 + $0x38] sm:$0xff]
    %v2146 = vld [vmem:[#allocation13 + $0x40] sm:$0xff]
    %v2147 = vld [vmem:[#allocation13 + $0x48] sm:$0xff]
    %v2148 = vld [vmem:[#allocation13 + $0x50] sm:$0xff]
    %v2149 = vld [vmem:[#allocation13 + $0x58] sm:$0xff]
    %v2150 = vld [vmem:[#allocation13 + $0x60] sm:$0xff]
    %v2151 = vld [vmem:[#allocation13 + $0x68] sm:$0xff]
    %v2152 = vld [vmem:[#allocation13 + $0x70] sm:$0xff]
    %v2153 = vld [vmem:[#allocation13 + $0x78] sm:$0xff]
    %v2154 = vld [vmem:[#allocation13 + $0x80] sm:$0xff]
    %v2155 = vld [vmem:[#allocation13 + $0x88] sm:$0xff]
    %v2156 = vld [vmem:[#allocation13 + $0x90] sm:$0xff]
    %v2157 = vld [vmem:[#allocation13 + $0x98] sm:$0xff]
    %v2158 = vld [vmem:[#allocation13 + $0xa0] sm:$0xff]
    %v2159 = vld [vmem:[#allocation13 + $0xa8] sm:$0xff]
    %v2160 = vld [vmem:[#allocation13 + $0xb0] sm:$0xff]
    %v2161 = vld [vmem:[#allocation13 + $0xb8] sm:$0xff]
    %v2162 = vld [vmem:[#allocation13 + $0xc0] sm:$0xff]
    %v2163 = vld [vmem:[#allocation13 + $0xc8] sm:$0xff]
    %v2164 = vld [vmem:[#allocation13 + $0xd0] sm:$0xff]
    %v2165 = vld [vmem:[#allocation13 + $0xd8] sm:$0xff]
    %v2166 = vld [vmem:[#allocation13 + $0xe0] sm:$0xff]
    %v2167 = vld [vmem:[#allocation13 + $0xe8] sm:$0xff]
    %v2168 = vld [vmem:[#allocation13 + $0xf0] sm:$0xff]
    %v2169 = vld [vmem:[#allocation13 + $0xf8] sm:$0xff]
    %v2170 = vld [vmem:[#allocation13 + $0x100] sm:$0xff]
    %v2171 = vld [vmem:[#allocation13 + $0x108] sm:$0xff]
    %v2172 = vld [vmem:[#allocation13 + $0x110] sm:$0xff]
    %v2173 = vld [vmem:[#allocation13 + $0x118] sm:$0xff]
    %v2174 = vld [vmem:[#allocation13 + $0x120] sm:$0xff]
    %v2175 = vld [vmem:[#allocation13 + $0x128] sm:$0xff]
    %v2176 = vld [vmem:[#allocation13 + $0x130] sm:$0xff]
    %v2177 = vld [vmem:[#allocation13 + $0x138] sm:$0xff]
    %v2178 = vld [vmem:[#allocation13 + $0x140] sm:$0xff]
    %v2179 = vld [vmem:[#allocation13 + $0x148] sm:$0xff]
    %v2180 = vld [vmem:[#allocation13 + $0x150] sm:$0xff]
    %v2181 = vld [vmem:[#allocation13 + $0x158] sm:$0xff]
    %v2182 = vld [vmem:[#allocation13 + $0x160] sm:$0xff]
    %v2183 = vld [vmem:[#allocation13 + $0x168] sm:$0xff]
    %v2184 = vld [vmem:[#allocation13 + $0x170] sm:$0xff]
    %v2185 = vld [vmem:[#allocation13 + $0x178] sm:$0xff]
    %v2186 = vld [vmem:[#allocation13 + $0x180] sm:$0xff]
    %v2187 = vld [vmem:[#allocation13 + $0x188] sm:$0xff]
    %v2188 = vld [vmem:[#allocation13 + $0x190] sm:$0xff]
    %v2189 = vld [vmem:[#allocation13 + $0x198] sm:$0xff]
    %v2190 = vld [vmem:[#allocation13 + $0x1a0] sm:$0xff]
    %v2191 = vld [vmem:[#allocation13 + $0x1a8] sm:$0xff]
    %v2192 = vld [vmem:[#allocation13 + $0x1b0] sm:$0xff]
    %v2193 = vld [vmem:[#allocation13 + $0x1b8] sm:$0xff]
    %v2194 = vld [vmem:[#allocation13 + $0x1c0] sm:$0xff]
    %v2195 = vld [vmem:[#allocation13 + $0x1c8] sm:$0xff]
    %v2196 = vld [vmem:[#allocation13 + $0x1d0] sm:$0xff]
    %v2197 = vld [vmem:[#allocation13 + $0x1d8] sm:$0xff]
    %v2198 = vld [vmem:[#allocation13 + $0x1e0] sm:$0xff]
    %v2199 = vld [vmem:[#allocation13 + $0x1e8] sm:$0xff]
    %v2200 = vld [vmem:[#allocation13 + $0x1f0] sm:$0xff]
    %v2201 = vld [vmem:[#allocation13 + $0x1f8] sm:$0xff]
    %v2202 = vld [vmem:[%s15] sm:$0x3]
    %v2204 = vlaneseq
    %v2205 = vshrl.u32 %v2204, 7
    %v2206 = vsub.s32 0, %v2205
    %v2207 = vrot.slane %v2202, %v2206
    %v2208 = vlaneseq
    %v2209 = vshrl.u32 %v2208, 7
    %v2210 = vsub.s32 1, %v2209
    %v2211 = vrot.slane %v2202, %v2210
    %v2278 = vunpack.c.l.b16 %v2138
    %v2279 = vunpack.c.h.b16 %v2138
    %v2280 = vunpack.c.l.b16 %v2139
    %v2281 = vunpack.c.h.b16 %v2139
    %v2282 = vunpack.c.l.b16 %v2140
    %v2283 = vunpack.c.h.b16 %v2140
    %v2284 = vunpack.c.l.b16 %v2141
    %v2285 = vunpack.c.h.b16 %v2141
    %v2286 = vunpack.c.l.b16 %v2142
    %v2287 = vunpack.c.h.b16 %v2142
    %v2288 = vunpack.c.l.b16 %v2143
    %v2289 = vunpack.c.h.b16 %v2143
    %v2290 = vunpack.c.l.b16 %v2144
    %v2291 = vunpack.c.h.b16 %v2144
    %v2292 = vunpack.c.l.b16 %v2145
    %v2293 = vunpack.c.h.b16 %v2145
    %v2294 = vunpack.c.l.b16 %v2146
    %v2295 = vunpack.c.h.b16 %v2146
    %v2296 = vunpack.c.l.b16 %v2147
    %v2297 = vunpack.c.h.b16 %v2147
    %v2298 = vunpack.c.l.b16 %v2148
    %v2299 = vunpack.c.h.b16 %v2148
    %v2300 = vunpack.c.l.b16 %v2149
    %v2301 = vunpack.c.h.b16 %v2149
    %v2302 = vunpack.c.l.b16 %v2150
    %v2303 = vunpack.c.h.b16 %v2150
    %v2304 = vunpack.c.l.b16 %v2151
    %v2305 = vunpack.c.h.b16 %v2151
    %v2306 = vunpack.c.l.b16 %v2152
    %v2307 = vunpack.c.h.b16 %v2152
    %v2308 = vunpack.c.l.b16 %v2153
    %v2309 = vunpack.c.h.b16 %v2153
    %v2310 = vunpack.c.l.b16 %v2154
    %v2311 = vunpack.c.h.b16 %v2154
    %v2312 = vunpack.c.l.b16 %v2155
    %v2313 = vunpack.c.h.b16 %v2155
    %v2314 = vunpack.c.l.b16 %v2156
    %v2315 = vunpack.c.h.b16 %v2156
    %v2316 = vunpack.c.l.b16 %v2157
    %v2317 = vunpack.c.h.b16 %v2157
    %v2318 = vunpack.c.l.b16 %v2158
    %v2319 = vunpack.c.h.b16 %v2158
    %v2320 = vunpack.c.l.b16 %v2159
    %v2321 = vunpack.c.h.b16 %v2159
    %v2322 = vunpack.c.l.b16 %v2160
    %v2323 = vunpack.c.h.b16 %v2160
    %v2324 = vunpack.c.l.b16 %v2161
    %v2325 = vunpack.c.h.b16 %v2161
    %v2326 = vunpack.c.l.b16 %v2162
    %v2327 = vunpack.c.h.b16 %v2162
    %v2328 = vunpack.c.l.b16 %v2163
    %v2329 = vunpack.c.h.b16 %v2163
    %v2330 = vunpack.c.l.b16 %v2164
    %v2331 = vunpack.c.h.b16 %v2164
    %v2332 = vunpack.c.l.b16 %v2165
    %v2333 = vunpack.c.h.b16 %v2165
    %v2334 = vunpack.c.l.b16 %v2166
    %v2335 = vunpack.c.h.b16 %v2166
    %v2336 = vunpack.c.l.b16 %v2167
    %v2337 = vunpack.c.h.b16 %v2167
    %v2338 = vunpack.c.l.b16 %v2168
    %v2339 = vunpack.c.h.b16 %v2168
    %v2340 = vunpack.c.l.b16 %v2169
    %v2341 = vunpack.c.h.b16 %v2169
    %v2342 = vunpack.c.l.b16 %v2170
    %v2343 = vunpack.c.h.b16 %v2170
    %v2344 = vunpack.c.l.b16 %v2171
    %v2345 = vunpack.c.h.b16 %v2171
    %v2346 = vunpack.c.l.b16 %v2172
    %v2347 = vunpack.c.h.b16 %v2172
    %v2348 = vunpack.c.l.b16 %v2173
    %v2349 = vunpack.c.h.b16 %v2173
    %v2350 = vunpack.c.l.b16 %v2174
    %v2351 = vunpack.c.h.b16 %v2174
    %v2352 = vunpack.c.l.b16 %v2175
    %v2353 = vunpack.c.h.b16 %v2175
    %v2354 = vunpack.c.l.b16 %v2176
    %v2355 = vunpack.c.h.b16 %v2176
    %v2356 = vunpack.c.l.b16 %v2177
    %v2357 = vunpack.c.h.b16 %v2177
    %v2358 = vunpack.c.l.b16 %v2178
    %v2359 = vunpack.c.h.b16 %v2178
    %v2360 = vunpack.c.l.b16 %v2179
    %v2361 = vunpack.c.h.b16 %v2179
    %v2362 = vunpack.c.l.b16 %v2180
    %v2363 = vunpack.c.h.b16 %v2180
    %v2364 = vunpack.c.l.b16 %v2181
    %v2365 = vunpack.c.h.b16 %v2181
    %v2366 = vunpack.c.l.b16 %v2182
    %v2367 = vunpack.c.h.b16 %v2182
    %v2368 = vunpack.c.l.b16 %v2183
    %v2369 = vunpack.c.h.b16 %v2183
    %v2370 = vunpack.c.l.b16 %v2184
    %v2371 = vunpack.c.h.b16 %v2184
    %v2372 = vunpack.c.l.b16 %v2185
    %v2373 = vunpack.c.h.b16 %v2185
    %v2374 = vunpack.c.l.b16 %v2186
    %v2375 = vunpack.c.h.b16 %v2186
    %v2376 = vunpack.c.l.b16 %v2187
    %v2377 = vunpack.c.h.b16 %v2187
    %v2378 = vunpack.c.l.b16 %v2188
    %v2379 = vunpack.c.h.b16 %v2188
    %v2380 = vunpack.c.l.b16 %v2189
    %v2381 = vunpack.c.h.b16 %v2189
    %v2382 = vunpack.c.l.b16 %v2190
    %v2383 = vunpack.c.h.b16 %v2190
    %v2384 = vunpack.c.l.b16 %v2191
    %v2385 = vunpack.c.h.b16 %v2191
    %v2386 = vunpack.c.l.b16 %v2192
    %v2387 = vunpack.c.h.b16 %v2192
    %v2388 = vunpack.c.l.b16 %v2193
    %v2389 = vunpack.c.h.b16 %v2193
    %v2390 = vunpack.c.l.b16 %v2194
    %v2391 = vunpack.c.h.b16 %v2194
    %v2392 = vunpack.c.l.b16 %v2195
    %v2393 = vunpack.c.h.b16 %v2195
    %v2394 = vunpack.c.l.b16 %v2196
    %v2395 = vunpack.c.h.b16 %v2196
    %v2396 = vunpack.c.l.b16 %v2197
    %v2397 = vunpack.c.h.b16 %v2197
    %v2398 = vunpack.c.l.b16 %v2198
    %v2399 = vunpack.c.h.b16 %v2198
    %v2400 = vunpack.c.l.b16 %v2199
    %v2401 = vunpack.c.h.b16 %v2199
    %v2402 = vunpack.c.l.b16 %v2200
    %v2403 = vunpack.c.h.b16 %v2200
    %v2404 = vunpack.c.l.b16 %v2201
    %v2405 = vunpack.c.h.b16 %v2201
    %v2406 = vpack.c.b16 %v2280, %v2278
    %v2407 = vpack.c.b16 %v2281, %v2279
    %v2408 = vpack.c.b16 %v2284, %v2282
    %v2409 = vpack.c.b16 %v2285, %v2283
    %v2410 = vpack.c.b16 %v2288, %v2286
    %v2411 = vpack.c.b16 %v2289, %v2287
    %v2412 = vpack.c.b16 %v2292, %v2290
    %v2413 = vpack.c.b16 %v2293, %v2291
    %v2414 = vpack.c.b16 %v2296, %v2294
    %v2415 = vpack.c.b16 %v2297, %v2295
    %v2416 = vpack.c.b16 %v2300, %v2298
    %v2417 = vpack.c.b16 %v2301, %v2299
    %v2418 = vpack.c.b16 %v2304, %v2302
    %v2419 = vpack.c.b16 %v2305, %v2303
    %v2420 = vpack.c.b16 %v2308, %v2306
    %v2421 = vpack.c.b16 %v2309, %v2307
    %v2422 = vpack.c.b16 %v2312, %v2310
    %v2423 = vpack.c.b16 %v2313, %v2311
    %v2424 = vpack.c.b16 %v2316, %v2314
    %v2425 = vpack.c.b16 %v2317, %v2315
    %v2426 = vpack.c.b16 %v2320, %v2318
    %v2427 = vpack.c.b16 %v2321, %v2319
    %v2428 = vpack.c.b16 %v2324, %v2322
    %v2429 = vpack.c.b16 %v2325, %v2323
    %v2430 = vpack.c.b16 %v2328, %v2326
    %v2431 = vpack.c.b16 %v2329, %v2327
    %v2432 = vpack.c.b16 %v2332, %v2330
    %v2433 = vpack.c.b16 %v2333, %v2331
    %v2434 = vpack.c.b16 %v2336, %v2334
    %v2435 = vpack.c.b16 %v2337, %v2335
    %v2436 = vpack.c.b16 %v2340, %v2338
    %v2437 = vpack.c.b16 %v2341, %v2339
    %v2438 = vpack.c.b16 %v2344, %v2342
    %v2439 = vpack.c.b16 %v2345, %v2343
    %v2440 = vpack.c.b16 %v2348, %v2346
    %v2441 = vpack.c.b16 %v2349, %v2347
    %v2442 = vpack.c.b16 %v2352, %v2350
    %v2443 = vpack.c.b16 %v2353, %v2351
    %v2444 = vpack.c.b16 %v2356, %v2354
    %v2445 = vpack.c.b16 %v2357, %v2355
    %v2446 = vpack.c.b16 %v2360, %v2358
    %v2447 = vpack.c.b16 %v2361, %v2359
    %v2448 = vpack.c.b16 %v2364, %v2362
    %v2449 = vpack.c.b16 %v2365, %v2363
    %v2450 = vpack.c.b16 %v2368, %v2366
    %v2451 = vpack.c.b16 %v2369, %v2367
    %v2452 = vpack.c.b16 %v2372, %v2370
    %v2453 = vpack.c.b16 %v2373, %v2371
    %v2454 = vpack.c.b16 %v2376, %v2374
    %v2455 = vpack.c.b16 %v2377, %v2375
    %v2456 = vpack.c.b16 %v2380, %v2378
    %v2457 = vpack.c.b16 %v2381, %v2379
    %v2458 = vpack.c.b16 %v2384, %v2382
    %v2459 = vpack.c.b16 %v2385, %v2383
    %v2460 = vpack.c.b16 %v2388, %v2386
    %v2461 = vpack.c.b16 %v2389, %v2387
    %v2462 = vpack.c.b16 %v2392, %v2390
    %v2463 = vpack.c.b16 %v2393, %v2391
    %v2464 = vpack.c.b16 %v2396, %v2394
    %v2465 = vpack.c.b16 %v2397, %v2395
    %v2466 = vpack.c.b16 %v2400, %v2398
    %v2467 = vpack.c.b16 %v2401, %v2399
    %v2468 = vpack.c.b16 %v2404, %v2402
    %v2469 = vpack.c.b16 %v2405, %v2403
    %2534 = vmatprep.subr.bf16.mxu0 %v2421
    %2535 = vmatpush1.bf16.msra.mxu0 %v2420
    %2536 = vmatprep.subr.bf16.mxu0 %v2419
    %2537 = vmatpush1.bf16.msra.mxu0 %v2418
    %2538 = vmatprep.subr.bf16.mxu0 %v2417
    %2539 = vmatpush1.bf16.msra.mxu0 %v2416
    %2540 = vmatprep.subr.bf16.mxu0 %v2415
    %2541 = vmatpush1.bf16.msra.mxu0 %v2414
    %2542 = vmatprep.subr.bf16.mxu0 %v2413
    %2543 = vmatpush1.bf16.msra.mxu0 %v2412
    %2544 = vmatprep.subr.bf16.mxu0 %v2411
    %2545 = vmatpush1.bf16.msra.mxu0 %v2410
    %2546 = vmatprep.subr.bf16.mxu0 %v2409
    %2547 = vmatpush1.bf16.msra.mxu0 %v2408
    %2548 = vmatprep.subr.bf16.mxu0 %v2407
    %2549 = vmatpush1.bf16.msra.mxu0 %v2406
    %2550 = vmatprep.subr.bf16.mxu0 %v2437
    %2551 = vmatpush2.bf16.msra.mxu0 %v2436
    %2552 = vmatprep.subr.bf16.mxu0 %v2435
    %2553 = vmatpush2.bf16.msra.mxu0 %v2434
    %2554 = vmatprep.subr.bf16.mxu0 %v2433
    %2555 = vmatpush2.bf16.msra.mxu0 %v2432
    %2556 = vmatprep.subr.bf16.mxu0 %v2431
    %2557 = vmatpush2.bf16.msra.mxu0 %v2430
    %2558 = vmatprep.subr.bf16.mxu0 %v2429
    %2559 = vmatpush2.bf16.msra.mxu0 %v2428
    %2560 = vmatprep.subr.bf16.mxu0 %v2427
    %2561 = vmatpush2.bf16.msra.mxu0 %v2426
    %2562 = vmatprep.subr.bf16.mxu0 %v2425
    %2563 = vmatpush2.bf16.msra.mxu0 %v2424
    %2564 = vmatprep.subr.bf16.mxu0 %v2423
    %2565 = vmatpush2.bf16.msra.mxu0 %v2422
    %2566 = vmatprep.mubr.bf16.mxu0 %v2135
    %2567 = vmatmul.mubr.bf16.gmra.mxu0 %v2134
    %v2568 = vpop.f32.mrf.mxu0
    %v2569 = vadd.f32 %v2207, %v2568
    %v2570 = vpop.f32.mrf.mxu0
    %v2571 = vadd.f32 %v2211, %v2570
    %v2572 = vpop.f32.mrf.mxu0
    %v2573 = vpop.f32.mrf.mxu0
    %2574 = vdwg.mxu0
    %2575 = vmatprep.subr.bf16.mxu0 %v2453
    %2576 = vmatpush1.bf16.msra.mxu0 %v2452
    %2577 = vmatprep.subr.bf16.mxu0 %v2451
    %2578 = vmatpush1.bf16.msra.mxu0 %v2450
    %2579 = vmatprep.subr.bf16.mxu0 %v2449
    %2580 = vmatpush1.bf16.msra.mxu0 %v2448
    %2581 = vmatprep.subr.bf16.mxu0 %v2447
    %2582 = vmatpush1.bf16.msra.mxu0 %v2446
    %2583 = vmatprep.subr.bf16.mxu0 %v2445
    %2584 = vmatpush1.bf16.msra.mxu0 %v2444
    %2585 = vmatprep.subr.bf16.mxu0 %v2443
    %2586 = vmatpush1.bf16.msra.mxu0 %v2442
    %2587 = vmatprep.subr.bf16.mxu0 %v2441
    %2588 = vmatpush1.bf16.msra.mxu0 %v2440
    %2589 = vmatprep.subr.bf16.mxu0 %v2439
    %2590 = vmatpush1.bf16.msra.mxu0 %v2438
    %2591 = vmatprep.subr.bf16.mxu0 %v2469
    %2592 = vmatpush2.bf16.msra.mxu0 %v2468
    %2593 = vmatprep.subr.bf16.mxu0 %v2467
    %2594 = vmatpush2.bf16.msra.mxu0 %v2466
    %2595 = vmatprep.subr.bf16.mxu0 %v2465
    %2596 = vmatpush2.bf16.msra.mxu0 %v2464
    %2597 = vmatprep.subr.bf16.mxu0 %v2463
    %2598 = vmatpush2.bf16.msra.mxu0 %v2462
    %2599 = vmatprep.subr.bf16.mxu0 %v2461
    %2600 = vmatpush2.bf16.msra.mxu0 %v2460
    %2601 = vmatprep.subr.bf16.mxu0 %v2459
    %2602 = vmatpush2.bf16.msra.mxu0 %v2458
    %2603 = vmatprep.subr.bf16.mxu0 %v2457
    %2604 = vmatpush2.bf16.msra.mxu0 %v2456
    %2605 = vmatprep.subr.bf16.mxu0 %v2455
    %2606 = vmatpush2.bf16.msra.mxu0 %v2454
    %2607 = vmatprep.mubr.bf16.mxu0 %v2137
    %2608 = vmatmul.mubr.bf16.gmra.mxu0 %v2136
    %v2609 = vpop.f32.mrf.mxu0
    %v2610 = vadd.f32 %v2569, %v2609
    %v2611 = vpop.f32.mrf.mxu0
    %v2612 = vadd.f32 %v2571, %v2611
    %v2613 = vpop.f32.mrf.mxu0
    %v2614 = vpop.f32.mrf.mxu0
    %2615 = vdwg.mxu0
    %v2616 = vmax.f32 %v2610, 0.0
    %v2617 = vmax.f32 %v2612, 0.0
    %v2618 = vpack.c.bf16 %v2616, %v2616
    %v2619 = vpack.c.bf16 %v2617, %v2617
    %v2620 = vld [vmem:[#allocation14] sm:$0xf]
    %v2621 = vld [vmem:[#allocation14 + $0x4] sm:$0xf]
    %v2622 = vld [vmem:[#allocation14 + $0x8] sm:$0xf]
    %v2623 = vld [vmem:[#allocation14 + $0xc] sm:$0xf]
    %v2624 = vld [vmem:[#allocation14 + $0x10] sm:$0xf]
    %v2625 = vld [vmem:[#allocation14 + $0x14] sm:$0xf]
    %v2626 = vld [vmem:[#allocation14 + $0x18] sm:$0xf]
    %v2627 = vld [vmem:[#allocation14 + $0x1c] sm:$0xf]
    %v2628 = vld [vmem:[#allocation14 + $0x20] sm:$0xf]
    %v2629 = vld [vmem:[#allocation14 + $0x24] sm:$0xf]
    %v2630 = vld [vmem:[#allocation14 + $0x28] sm:$0xf]
    %v2631 = vld [vmem:[#allocation14 + $0x2c] sm:$0xf]
    %v2632 = vld [vmem:[#allocation14 + $0x30] sm:$0xf]
    %v2633 = vld [vmem:[#allocation14 + $0x34] sm:$0xf]
    %v2634 = vld [vmem:[#allocation14 + $0x38] sm:$0xf]
    %v2635 = vld [vmem:[#allocation14 + $0x3c] sm:$0xf]
    %v2636 = vld [vmem:[#allocation14 + $0x40] sm:$0xf]
    %v2637 = vld [vmem:[#allocation14 + $0x44] sm:$0xf]
    %v2638 = vld [vmem:[#allocation14 + $0x48] sm:$0xf]
    %v2639 = vld [vmem:[#allocation14 + $0x4c] sm:$0xf]
    %v2640 = vld [vmem:[#allocation14 + $0x50] sm:$0xf]
    %v2641 = vld [vmem:[#allocation14 + $0x54] sm:$0xf]
    %v2642 = vld [vmem:[#allocation14 + $0x58] sm:$0xf]
    %v2643 = vld [vmem:[#allocation14 + $0x5c] sm:$0xf]
    %v2644 = vld [vmem:[#allocation14 + $0x60] sm:$0xf]
    %v2645 = vld [vmem:[#allocation14 + $0x64] sm:$0xf]
    %v2646 = vld [vmem:[#allocation14 + $0x68] sm:$0xf]
    %v2647 = vld [vmem:[#allocation14 + $0x6c] sm:$0xf]
    %v2648 = vld [vmem:[#allocation14 + $0x70] sm:$0xf]
    %v2649 = vld [vmem:[#allocation14 + $0x74] sm:$0xf]
    %v2650 = vld [vmem:[#allocation14 + $0x78] sm:$0xf]
    %v2651 = vld [vmem:[#allocation14 + $0x7c] sm:$0xf]
    %v2652 = vld [vmem:[%s17] sm:$0x1]
    %v2654 = vlaneseq
    %v2655 = vshrl.u32 %v2654, 7
    %v2656 = vsub.s32 0, %v2655
    %v2657 = vrot.slane %v2652, %v2656
    %v2691 = vunpack.c.l.b16 %v2620
    %v2692 = vunpack.c.l.b16 %v2621
    %v2693 = vunpack.c.l.b16 %v2622
    %v2694 = vunpack.c.l.b16 %v2623
    %v2695 = vunpack.c.l.b16 %v2624
    %v2696 = vunpack.c.l.b16 %v2625
    %v2697 = vunpack.c.l.b16 %v2626
    %v2698 = vunpack.c.l.b16 %v2627
    %v2699 = vunpack.c.l.b16 %v2628
    %v2700 = vunpack.c.l.b16 %v2629
    %v2701 = vunpack.c.l.b16 %v2630
    %v2702 = vunpack.c.l.b16 %v2631
    %v2703 = vunpack.c.l.b16 %v2632
    %v2704 = vunpack.c.l.b16 %v2633
    %v2705 = vunpack.c.l.b16 %v2634
    %v2706 = vunpack.c.l.b16 %v2635
    %v2707 = vunpack.c.l.b16 %v2636
    %v2708 = vunpack.c.l.b16 %v2637
    %v2709 = vunpack.c.l.b16 %v2638
    %v2710 = vunpack.c.l.b16 %v2639
    %v2711 = vunpack.c.l.b16 %v2640
    %v2712 = vunpack.c.l.b16 %v2641
    %v2713 = vunpack.c.l.b16 %v2642
    %v2714 = vunpack.c.l.b16 %v2643
    %v2715 = vunpack.c.l.b16 %v2644
    %v2716 = vunpack.c.l.b16 %v2645
    %v2717 = vunpack.c.l.b16 %v2646
    %v2718 = vunpack.c.l.b16 %v2647
    %v2719 = vunpack.c.l.b16 %v2648
    %v2720 = vunpack.c.l.b16 %v2649
    %v2721 = vunpack.c.l.b16 %v2650
    %v2722 = vunpack.c.l.b16 %v2651
    %v2723 = vpack.c.b16 %v2692, %v2691
    %v2724 = vpack.c.b16 %v2694, %v2693
    %v2725 = vpack.c.b16 %v2696, %v2695
    %v2726 = vpack.c.b16 %v2698, %v2697
    %v2727 = vpack.c.b16 %v2700, %v2699
    %v2728 = vpack.c.b16 %v2702, %v2701
    %v2729 = vpack.c.b16 %v2704, %v2703
    %v2730 = vpack.c.b16 %v2706, %v2705
    %v2731 = vpack.c.b16 %v2708, %v2707
    %v2732 = vpack.c.b16 %v2710, %v2709
    %v2733 = vpack.c.b16 %v2712, %v2711
    %v2734 = vpack.c.b16 %v2714, %v2713
    %v2735 = vpack.c.b16 %v2716, %v2715
    %v2736 = vpack.c.b16 %v2718, %v2717
    %v2737 = vpack.c.b16 %v2720, %v2719
    %v2738 = vpack.c.b16 %v2722, %v2721
    %2755 = vmatprep.subr.bf16.mxu0 0
    %2756 = vmatpush1.bf16.msra.mxu0 %v2730
    %2757 = vmatprep.subr.bf16.mxu0 0
    %2758 = vmatpush1.bf16.msra.mxu0 %v2729
    %2759 = vmatprep.subr.bf16.mxu0 0
    %2760 = vmatpush1.bf16.msra.mxu0 %v2728
    %2761 = vmatprep.subr.bf16.mxu0 0
    %2762 = vmatpush1.bf16.msra.mxu0 %v2727
    %2763 = vmatprep.subr.bf16.mxu0 0
    %2764 = vmatpush1.bf16.msra.mxu0 %v2726
    %2765 = vmatprep.subr.bf16.mxu0 0
    %2766 = vmatpush1.bf16.msra.mxu0 %v2725
    %2767 = vmatprep.subr.bf16.mxu0 0
    %2768 = vmatpush1.bf16.msra.mxu0 %v2724
    %2769 = vmatprep.subr.bf16.mxu0 0
    %2770 = vmatpush1.bf16.msra.mxu0 %v2723
    %2771 = vmatprep.subr.bf16.mxu0 0
    %2772 = vmatpush2.bf16.msra.mxu0 %v2738
    %2773 = vmatprep.subr.bf16.mxu0 0
    %2774 = vmatpush2.bf16.msra.mxu0 %v2737
    %2775 = vmatprep.subr.bf16.mxu0 0
    %2776 = vmatpush2.bf16.msra.mxu0 %v2736
    %2777 = vmatprep.subr.bf16.mxu0 0
    %2778 = vmatpush2.bf16.msra.mxu0 %v2735
    %2779 = vmatprep.subr.bf16.mxu0 0
    %2780 = vmatpush2.bf16.msra.mxu0 %v2734
    %2781 = vmatprep.subr.bf16.mxu0 0
    %2782 = vmatpush2.bf16.msra.mxu0 %v2733
    %2783 = vmatprep.subr.bf16.mxu0 0
    %2784 = vmatpush2.bf16.msra.mxu0 %v2732
    %2785 = vmatprep.subr.bf16.mxu0 0
    %2786 = vmatpush2.bf16.msra.mxu0 %v2731
    %2787 = vmatprep.mubr.bf16.mxu0 %v2619
    %2788 = vmatmul.mubr.bf16.gmra.mxu0 %v2618
    %v2789 = vpop.f32.mrf.mxu0
    %v2790 = vadd.f32 %v2657, %v2789
    %v2791 = vpop.f32.mrf.mxu0
    %v2792 = vpop.f32.mrf.mxu0
    %v2793 = vpop.f32.mrf.mxu0
    %2794 = vdwg.mxu0
    %vm2795 = vcmask 238592
    %2796 = vst.msk [vmem:[#allocation17] sm:$0x3] %vm2795, %v2790
    // Predicated region
    $region106: #{qnet_forward.1} parent=1 // pred_check
      _
    $region107: #{qnet_forward.1} parent=1 // pred_check_branch
      %2798 = sbr.rel (0) target = $region109
    $region108: #{qnet_forward.1} parent=1 // pred_region
      %s2800 = ssub.s32 32, 32
      %2801 = vsyncadd [#allocation4], %s2800
      %s2803 = sshll.u32 [#allocation16], 4
      %s2804 = int_to_ptr.vmem [resolvable:$true] %s2803
      %2806 = dma.vmem_to_hbm [thread:$0]  %s2804, 32, %s18, [#allocation4]
    $region109: #{qnet_forward.1} parent=1 // pred_fallthru
      _
    // Predicated region
    $region110: #{qnet_forward.1} parent=1 // pred_check
      _
    $region111: #{qnet_forward.1} parent=1 // pred_check_branch
      %2808 = sbr.rel (0) target = $region113
    $region112: #{qnet_forward.1} parent=1 // pred_region
      %s2810 = ssub.s32 32, 32
      %2811 = vsyncadd [#allocation18], %s2810
      %s2813 = sshll.u32 [#allocation17], 4
      %s2814 = int_to_ptr.vmem [resolvable:$true] %s2813
      %2816 = dma.vmem_to_hbm [thread:$0]  %s2814, 32, %s19, [#allocation18]
    $region113: #{qnet_forward.1} parent=1 // pred_fallthru
      _
    // Predicated region
    $region114: #{qnet_forward.1} parent=1 // pred_check
      _
    $region115: #{qnet_forward.1} parent=1 // pred_check_branch
      %2818 = sbr.rel (0) target = $region117
    $region116: #{qnet_forward.1} parent=1 // pred_region
      %2819 = dma.done [#allocation4], 32
    $region117: #{qnet_forward.1} parent=1 // pred_fallthru
      _
    // Predicated region
    $region118: #{qnet_forward.1} parent=1 // pred_check
      _
    $region119: #{qnet_forward.1} parent=1 // pred_check_branch
      %2821 = sbr.rel (0) target = $region121
    $region120: #{qnet_forward.1} parent=1 // pred_region
      %2822 = dma.done [#allocation18], 32
    $region121: #{qnet_forward.1} parent=1 // pred_fallthru
      _
    %2823 = vsyncpa [#allocation3], 1
    %2824 = vsyncpa [#allocation6], 1
    %2825 = vsyncpa [#allocation9], 1
    %2826 = vsyncpa [#allocation12], 1
    %2827 = vsyncpa [#allocation15], 1
    %2828 = vsyncpa [#allocation4], 1
    %2829 = vsyncpa [#allocation18], 1

</llo_original>
